<compile_context>
chip_gen: v7x
topology: tpu7x:2x2x1
jax: 0.10.0
libtpu: 0.0.40
codegen_flags: <defaults>
</compile_context>

<pallas_src>
from math import sqrt
from functools import partial

import jax
import jax.numpy as jnp
from jax.experimental import pallas as pl
from jax.experimental.pallas import tpu as pltpu

EMBED_DIM = 16          # matches `embedding_dim = 16` in the reference file
FF_DIM = 32             # feed-forward hidden width
NUM_LAYERS = 2
EPS = 1e-5              # nn.LayerNorm default
# Exact softmax denominator by default (closer to the PyTorch reference); set True to
# move the reciprocal to the EUP slot (~free) at ~1e-4 relative error.
APPROX_RECIPROCAL = False


def _layernorm(x, gamma, beta):
    mu = jnp.mean(x, axis=-1, keepdims=True)
    var = jnp.mean((x - mu) ** 2, axis=-1, keepdims=True)       # biased var, like PyTorch
    return (x - mu) * jax.lax.rsqrt(var + EPS) * gamma + beta


def _encoder_kernel(x_ref, wqkv_ref, bqkv_ref, wo_ref, w1_ref, w2_ref,
                    bias_ref, ln_ref, o_ref, *, num_layers):
    x = x_ref[...].astype(jnp.float32)           # (S, D): one sequence per grid step
    S, D = x.shape
    F = w1_ref.shape[1]

    # Weights: constant-indexed BlockSpecs -> DMA'd once, read straight from VMEM.
    wqkv, wo, w1, w2 = wqkv_ref[...], wo_ref[...], w1_ref[...], w2_ref[...]

    # Hoisted per-tile broadcasts (JAX does not CSE broadcast_in_dim; do them once,
    # and only at the (S, .) tile size).  Biases are row-packed -> lane-0 aligned slices.
    bqkv = jnp.broadcast_to(bqkv_ref[...], (S, 3 * D))
    bo   = jnp.broadcast_to(bias_ref[0:1, :D], (S, D))
    b1   = jnp.broadcast_to(bias_ref[1:2, :F], (S, F))
    b2   = jnp.broadcast_to(bias_ref[2:3, :D], (S, D))
    g1   = jnp.broadcast_to(ln_ref[0:1, :], (S, D))
    be1  = jnp.broadcast_to(ln_ref[1:2, :], (S, D))
    g2   = jnp.broadcast_to(ln_ref[2:3, :], (S, D))
    be2  = jnp.broadcast_to(ln_ref[3:4, :], (S, D))

    def layer(_, x):
        # Fused q/k/v projection; 1/sqrt(D) already folded into wqkv[:, :D] / bqkv[:, :D].
        qkv = jnp.dot(x, wqkv, preferred_element_type=jnp.float32) + bqkv
        q, k, v = qkv[:, :D], qkv[:, D:2 * D], qkv[:, 2 * D:]

        # q @ k^T via dot_general contracting the feature axis of both operands -- no
        # materialized transpose.  (If a profile at larger D shows a hidden per-layer
        # XLU transpose, materialize k^T once per layer instead.)
        scores = jax.lax.dot_general(q, k, (((1,), (1,)), ((), ())),
                                     preferred_element_type=jnp.float32)
        scores = scores - jnp.max(scores, axis=-1, keepdims=True)   # stable softmax
        e = jnp.exp(scores)
        attn_w = e * pl.reciprocal(jnp.sum(e, axis=-1, keepdims=True),
                                   approx=APPROX_RECIPROCAL)

        attn = jnp.dot(attn_w, v, preferred_element_type=jnp.float32)
        attn = jnp.dot(attn, wo, preferred_element_type=jnp.float32) + bo

        h = _layernorm(x + attn, g1, be1)                            # add & norm 1

        ff = jnp.maximum(
            jnp.dot(h, w1, preferred_element_type=jnp.float32) + b1, 0.0)
        ff = jnp.dot(ff, w2, preferred_element_type=jnp.float32) + b2

        return _layernorm(h + ff, g2, be2)                           # add & norm 2

    # Deep-copied clones share one parameter set -> the loop carry is just x; a visible
    # fori_loop bounds vreg live ranges as depth grows (unroll=True for LLO visibility).
    x = jax.lax.fori_loop(0, num_layers, layer, x, unroll=True)
    o_ref[...] = x.astype(o_ref.dtype)

    # TODO(synk): for realistic sizes (S in the thousands, D >= 1024) the per-sequence
    # (S, S) score slab must become flash-style q/k tiling with generation-aware tiles
    # (~256-row q tiles under v7x's 64 MiB VMEM vs ~512 on v5e/v6e's 128 MiB), and
    # matmul operands should be fed to the MXU in bf16 (keep f32 accumulate and f32
    # softmax/LayerNorm).  At D=16 the store path is lane-masked (<128 lanes) and the
    # MXU is padding-dominated regardless -- inherent to the module's embedding_dim.


def transformer_encoder(src, params, num_layers=NUM_LAYERS):
    """forward: output = src; for mod in self.layers: output = mod(output).
    (The module's trailing self.norm is NOT applied in forward.)"""
    B, S, D = src.shape
    weights = [params["wqkv"], params["bqkv"], params["wo"],
               params["w1"], params["w2"], params["bias"], params["ln"]]

    seq_spec = pl.BlockSpec((None, S, D), lambda b: (b, 0, 0))        # one sequence / step
    weight_specs = [pl.BlockSpec(w.shape, lambda b: (0, 0)) for w in weights]

    return pl.pallas_call(
        partial(_encoder_kernel, num_layers=num_layers),
        out_shape=jax.ShapeDtypeStruct((B, S, D), src.dtype),
        grid=(B,),
        in_specs=[seq_spec] + weight_specs,
        out_specs=seq_spec,
        # Output reuses src's HBM slab; src is fully consumed before the final store.
        input_output_aliases={0: 0},
        compiler_params=pltpu.CompilerParams(
            # batch axis shards across TensorCores on v7x; plain loop on v5e/v6e
            dimension_semantics=("parallel",),
            # explicit scoped-VMEM ceiling (v5e's default is only 16 MiB)
            vmem_limit_bytes=32 * 1024 * 1024,
        ),
    )(src, *weights)


def init_params(key):
    """PyTorch-style nn.Linear init (uniform +/-1/sqrt(fan_in)), packed for the kernel.
    Linear weights stored pre-transposed as (in, out) so the kernel computes x @ W + b."""
    D, F = EMBED_DIM, FF_DIM
    keys = jax.random.split(key, 6)

    def linear(k, fan_in, fan_out):
        bound = 1.0 / sqrt(fan_in)
        kw, kb = jax.random.split(k)
        w = jax.random.uniform(kw, (fan_out, fan_in), jnp.float32, -bound, bound)
        b = jax.random.uniform(kb, (fan_out,), jnp.float32, -bound, bound)
        return w.T, b.reshape(1, fan_out)

    wq, bq = linear(keys[0], D, D)
    wk, bk = linear(keys[1], D, D)
    wv, bv = linear(keys[2], D, D)
    wo, bo = linear(keys[3], D, D)
    w1, b1 = linear(keys[4], D, F)
    w2, b2 = linear(keys[5], F, D)

    # Fold the 1/sqrt(D) attention scale into the q projection (host-side constant).
    scale = 1.0 / sqrt(D)
    wq, bq = wq * scale, bq * scale

    wqkv = jnp.concatenate([wq, wk, wv], axis=1)            # (D, 3D)
    bqkv = jnp.concatenate([bq, bk, bv], axis=1)            # (1, 3D)

    # Row-wise bias pack: every bias starts at lane 0 (cheap sublane selects in-kernel).
    W = max(D, F)
    pad = lambda b: jnp.pad(b, ((0, 0), (0, W - b.shape[1])))
    bias = jnp.concatenate([pad(bo), pad(b1), pad(b2)], axis=0)   # (3, max(D, F))

    ln = jnp.concatenate([jnp.ones((1, D), jnp.float32),    # gamma1
                          jnp.zeros((1, D), jnp.float32),   # beta1
                          jnp.ones((1, D), jnp.float32),    # gamma2
                          jnp.zeros((1, D), jnp.float32)],  # beta2
                         axis=0)                            # (4, D)
    return dict(wqkv=wqkv, bqkv=bqkv, wo=wo, w1=w1, w2=w2, bias=bias, ln=ln)


if __name__ == "__main__":
    key = jax.random.PRNGKey(0)
    kx, kp = jax.random.split(key)

    B, S, D = 2, 8, EMBED_DIM
    src = jax.random.normal(kx, (B, S, D), dtype=jnp.float32)
    params = init_params(kp)

    out = jax.block_until_ready(transformer_encoder(src, params, NUM_LAYERS))

    assert out.shape == (B, S, D), out.shape
    assert out.dtype == jnp.float32
    assert bool(jnp.all(jnp.isfinite(out)))
    print("KERNEL_OK")
</pallas_src>

<mosaic_0001>
module attributes {stable_mosaic.version = 11 : i64} {
  func.func @_encoder_kernel(%arg0: i32, %arg1: memref<1x8x16xf32, #tpu.memory_space<vmem>>, %arg2: memref<16x48xf32, #tpu.memory_space<vmem>>, %arg3: memref<1x48xf32, #tpu.memory_space<vmem>>, %arg4: memref<16x16xf32, #tpu.memory_space<vmem>>, %arg5: memref<16x32xf32, #tpu.memory_space<vmem>>, %arg6: memref<32x16xf32, #tpu.memory_space<vmem>>, %arg7: memref<3x32xf32, #tpu.memory_space<vmem>>, %arg8: memref<4x16xf32, #tpu.memory_space<vmem>>, %arg9: memref<1x8x16xf32, #tpu.memory_space<vmem>>) attributes {dimension_semantics = [#tpu.dimension_semantics<parallel>], iteration_bounds = array<i64: 2>, scalar_prefetch = 0 : i64, scratch_operands = 0 : i64, tpu.core_type = #tpu.core_type<tc>, window_params = [{transform_indices = @transform_0, window_bounds = array<i64: 1, 8, 16>}, {pipeline_mode = #tpu.pipeline_mode<synchronous>, transform_indices = @transform_1, window_bounds = array<i64: 16, 48>}, {pipeline_mode = #tpu.pipeline_mode<synchronous>, transform_indices = @transform_2, window_bounds = array<i64: 1, 48>}, {pipeline_mode = #tpu.pipeline_mode<synchronous>, transform_indices = @transform_3, window_bounds = array<i64: 16, 16>}, {pipeline_mode = #tpu.pipeline_mode<synchronous>, transform_indices = @transform_4, window_bounds = array<i64: 16, 32>}, {pipeline_mode = #tpu.pipeline_mode<synchronous>, transform_indices = @transform_5, window_bounds = array<i64: 32, 16>}, {pipeline_mode = #tpu.pipeline_mode<synchronous>, transform_indices = @transform_6, window_bounds = array<i64: 3, 32>}, {pipeline_mode = #tpu.pipeline_mode<synchronous>, transform_indices = @transform_7, window_bounds = array<i64: 4, 16>}, {transform_indices = @transform_8, window_bounds = array<i64: 1, 8, 16>}]} {
    %c0 = arith.constant 0 : index
    %c0_0 = arith.constant 0 : index
    %c0_1 = arith.constant 0 : index
    %0 = vector.load %arg1[%c0, %c0_0, %c0_1] : memref<1x8x16xf32, #tpu.memory_space<vmem>>, vector<1x8x16xf32>
    %1 = vector.shape_cast %0 : vector<1x8x16xf32> to vector<8x16xf32>
    %c0_2 = arith.constant 0 : index
    %c0_3 = arith.constant 0 : index
    %2 = vector.load %arg2[%c0_2, %c0_3] : memref<16x48xf32, #tpu.memory_space<vmem>>, vector<16x48xf32>
    %c0_4 = arith.constant 0 : index
    %c0_5 = arith.constant 0 : index
    %3 = vector.load %arg4[%c0_4, %c0_5] : memref<16x16xf32, #tpu.memory_space<vmem>>, vector<16x16xf32>
    %c0_6 = arith.constant 0 : index
    %c0_7 = arith.constant 0 : index
    %4 = vector.load %arg5[%c0_6, %c0_7] : memref<16x32xf32, #tpu.memory_space<vmem>>, vector<16x32xf32>
    %c0_8 = arith.constant 0 : index
    %c0_9 = arith.constant 0 : index
    %5 = vector.load %arg6[%c0_8, %c0_9] : memref<32x16xf32, #tpu.memory_space<vmem>>, vector<32x16xf32>
    %c0_10 = arith.constant 0 : index
    %c0_11 = arith.constant 0 : index
    %6 = vector.load %arg3[%c0_10, %c0_11] : memref<1x48xf32, #tpu.memory_space<vmem>>, vector<1x48xf32>
    %7 = vector.shape_cast %6 : vector<1x48xf32> to vector<1x48xf32>
    %8 = vector.broadcast %7 : vector<1x48xf32> to vector<8x48xf32>
    %c0_12 = arith.constant 0 : index
    %c0_13 = arith.constant 0 : index
    %9 = vector.load %arg7[%c0_12, %c0_13] : memref<3x32xf32, #tpu.memory_space<vmem>>, vector<1x16xf32>
    %10 = vector.shape_cast %9 : vector<1x16xf32> to vector<1x16xf32>
    %11 = vector.broadcast %10 : vector<1x16xf32> to vector<8x16xf32>
    %c1 = arith.constant 1 : index
    %c0_14 = arith.constant 0 : index
    %12 = vector.load %arg7[%c1, %c0_14] : memref<3x32xf32, #tpu.memory_space<vmem>>, vector<1x32xf32>
    %13 = vector.shape_cast %12 : vector<1x32xf32> to vector<1x32xf32>
    %14 = vector.broadcast %13 : vector<1x32xf32> to vector<8x32xf32>
    %c2 = arith.constant 2 : index
    %c0_15 = arith.constant 0 : index
    %15 = vector.load %arg7[%c2, %c0_15] : memref<3x32xf32, #tpu.memory_space<vmem>>, vector<1x16xf32>
    %16 = vector.shape_cast %15 : vector<1x16xf32> to vector<1x16xf32>
    %17 = vector.broadcast %16 : vector<1x16xf32> to vector<8x16xf32>
    %c0_16 = arith.constant 0 : index
    %c0_17 = arith.constant 0 : index
    %18 = vector.load %arg8[%c0_16, %c0_17] : memref<4x16xf32, #tpu.memory_space<vmem>>, vector<1x16xf32>
    %19 = vector.shape_cast %18 : vector<1x16xf32> to vector<1x16xf32>
    %20 = vector.broadcast %19 : vector<1x16xf32> to vector<8x16xf32>
    %c1_18 = arith.constant 1 : index
    %c0_19 = arith.constant 0 : index
    %21 = vector.load %arg8[%c1_18, %c0_19] : memref<4x16xf32, #tpu.memory_space<vmem>>, vector<1x16xf32>
    %22 = vector.shape_cast %21 : vector<1x16xf32> to vector<1x16xf32>
    %23 = vector.broadcast %22 : vector<1x16xf32> to vector<8x16xf32>
    %c2_20 = arith.constant 2 : index
    %c0_21 = arith.constant 0 : index
    %24 = vector.load %arg8[%c2_20, %c0_21] : memref<4x16xf32, #tpu.memory_space<vmem>>, vector<1x16xf32>
    %25 = vector.shape_cast %24 : vector<1x16xf32> to vector<1x16xf32>
    %26 = vector.broadcast %25 : vector<1x16xf32> to vector<8x16xf32>
    %c3 = arith.constant 3 : index
    %c0_22 = arith.constant 0 : index
    %27 = vector.load %arg8[%c3, %c0_22] : memref<4x16xf32, #tpu.memory_space<vmem>>, vector<1x16xf32>
    %28 = vector.shape_cast %27 : vector<1x16xf32> to vector<1x16xf32>
    %29 = vector.broadcast %28 : vector<1x16xf32> to vector<8x16xf32>
    %c0_i32 = arith.constant 0 : i32
    %cst = arith.constant dense<0.000000e+00> : vector<8x48xf32>
    %30 = tpu.matmul %1, %2, %cst {dimension_numbers = #tpu.dot_dimension_numbers<[1], [0], [0], [1], [0, 0, 1, 1], [], []>} : vector<8x16xf32>, vector<16x48xf32>, vector<8x48xf32> -> vector<8x48xf32>
    %31 = arith.addf %30, %8 : vector<8x48xf32>
    %32 = vector.extract_strided_slice %31 {offsets = [0, 0], sizes = [8, 16], strides = [1, 1]} : vector<8x48xf32> to vector<8x16xf32>
    %33 = vector.extract_strided_slice %31 {offsets = [0, 16], sizes = [8, 16], strides = [1, 1]} : vector<8x48xf32> to vector<8x16xf32>
    %34 = vector.extract_strided_slice %31 {offsets = [0, 32], sizes = [8, 16], strides = [1, 1]} : vector<8x48xf32> to vector<8x16xf32>
    %cst_23 = arith.constant dense<0.000000e+00> : vector<8x8xf32>
    %35 = tpu.matmul %32, %33, %cst_23 {dimension_numbers = #tpu.dot_dimension_numbers<[1], [1], [0], [0], [0, 0, 1, 0], [], []>} : vector<8x16xf32>, vector<8x16xf32>, vector<8x8xf32> -> vector<8x8xf32>
    %cst_24 = arith.constant dense<0xFF800000> : vector<8xf32>
    %36 = vector.multi_reduction <maximumf>, %35, %cst_24 [1] : vector<8x8xf32> to vector<8xf32>
    %37 = vector.shape_cast %36 : vector<8xf32> to vector<8x1xf32>
    %38 = vector.broadcast %37 : vector<8x1xf32> to vector<8x8xf32>
    %39 = arith.subf %35, %38 : vector<8x8xf32>
    %40 = math.exp %39 : vector<8x8xf32>
    %cst_25 = arith.constant dense<0.000000e+00> : vector<8xf32>
    %41 = vector.multi_reduction <add>, %40, %cst_25 [1] : vector<8x8xf32> to vector<8xf32>
    %42 = vector.shape_cast %41 : vector<8xf32> to vector<8x1xf32>
    %43 = tpu.reciprocal %42 : vector<8x1xf32> -> vector<8x1xf32>
    %44 = vector.broadcast %43 : vector<8x1xf32> to vector<8x8xf32>
    %45 = arith.mulf %40, %44 : vector<8x8xf32>
    %cst_26 = arith.constant dense<0.000000e+00> : vector<8x16xf32>
    %46 = tpu.matmul %45, %34, %cst_26 {dimension_numbers = #tpu.dot_dimension_numbers<[1], [0], [0], [1], [0, 0, 1, 1], [], []>} : vector<8x8xf32>, vector<8x16xf32>, vector<8x16xf32> -> vector<8x16xf32>
    %cst_27 = arith.constant dense<0.000000e+00> : vector<8x16xf32>
    %47 = tpu.matmul %46, %3, %cst_27 {dimension_numbers = #tpu.dot_dimension_numbers<[1], [0], [0], [1], [0, 0, 1, 1], [], []>} : vector<8x16xf32>, vector<16x16xf32>, vector<8x16xf32> -> vector<8x16xf32>
    %48 = arith.addf %47, %11 : vector<8x16xf32>
    %49 = arith.addf %1, %48 : vector<8x16xf32>
    %cst_28 = arith.constant dense<0.000000e+00> : vector<8xf32>
    %50 = vector.multi_reduction <add>, %49, %cst_28 [1] : vector<8x16xf32> to vector<8xf32>
    %51 = vector.shape_cast %50 : vector<8xf32> to vector<8x1xf32>
    %cst_29 = arith.constant 1.600000e+01 : f32
    %52 = vector.broadcast %cst_29 : f32 to vector<8x1xf32>
    %53 = arith.divf %51, %52 : vector<8x1xf32>
    %54 = vector.broadcast %53 : vector<8x1xf32> to vector<8x16xf32>
    %55 = arith.subf %49, %54 : vector<8x16xf32>
    %56 = arith.mulf %55, %55 : vector<8x16xf32>
    %cst_30 = arith.constant dense<0.000000e+00> : vector<8xf32>
    %57 = vector.multi_reduction <add>, %56, %cst_30 [1] : vector<8x16xf32> to vector<8xf32>
    %58 = vector.shape_cast %57 : vector<8xf32> to vector<8x1xf32>
    %cst_31 = arith.constant 1.600000e+01 : f32
    %59 = vector.broadcast %cst_31 : f32 to vector<8x1xf32>
    %60 = arith.divf %58, %59 : vector<8x1xf32>
    %61 = vector.broadcast %53 : vector<8x1xf32> to vector<8x16xf32>
    %62 = arith.subf %49, %61 : vector<8x16xf32>
    %cst_32 = arith.constant 9.99999974E-6 : f32
    %63 = vector.broadcast %cst_32 : f32 to vector<8x1xf32>
    %64 = arith.addf %60, %63 : vector<8x1xf32>
    %65 = math.rsqrt %64 : vector<8x1xf32>
    %66 = vector.broadcast %65 : vector<8x1xf32> to vector<8x16xf32>
    %67 = arith.mulf %62, %66 : vector<8x16xf32>
    %68 = arith.mulf %67, %20 : vector<8x16xf32>
    %69 = arith.addf %68, %23 : vector<8x16xf32>
    %cst_33 = arith.constant dense<0.000000e+00> : vector<8x32xf32>
    %70 = tpu.matmul %69, %4, %cst_33 {dimension_numbers = #tpu.dot_dimension_numbers<[1], [0], [0], [1], [0, 0, 1, 1], [], []>} : vector<8x16xf32>, vector<16x32xf32>, vector<8x32xf32> -> vector<8x32xf32>
    %71 = arith.addf %70, %14 : vector<8x32xf32>
    %cst_34 = arith.constant 0.000000e+00 : f32
    %72 = vector.broadcast %cst_34 : f32 to vector<8x32xf32>
    %73 = arith.maximumf %71, %72 : vector<8x32xf32>
    %cst_35 = arith.constant dense<0.000000e+00> : vector<8x16xf32>
    %74 = tpu.matmul %73, %5, %cst_35 {dimension_numbers = #tpu.dot_dimension_numbers<[1], [0], [0], [1], [0, 0, 1, 1], [], []>} : vector<8x32xf32>, vector<32x16xf32>, vector<8x16xf32> -> vector<8x16xf32>
    %75 = arith.addf %74, %17 : vector<8x16xf32>
    %76 = arith.addf %69, %75 : vector<8x16xf32>
    %cst_36 = arith.constant dense<0.000000e+00> : vector<8xf32>
    %77 = vector.multi_reduction <add>, %76, %cst_36 [1] : vector<8x16xf32> to vector<8xf32>
    %78 = vector.shape_cast %77 : vector<8xf32> to vector<8x1xf32>
    %cst_37 = arith.constant 1.600000e+01 : f32
    %79 = vector.broadcast %cst_37 : f32 to vector<8x1xf32>
    %80 = arith.divf %78, %79 : vector<8x1xf32>
    %81 = vector.broadcast %80 : vector<8x1xf32> to vector<8x16xf32>
    %82 = arith.subf %76, %81 : vector<8x16xf32>
    %83 = arith.mulf %82, %82 : vector<8x16xf32>
    %cst_38 = arith.constant dense<0.000000e+00> : vector<8xf32>
    %84 = vector.multi_reduction <add>, %83, %cst_38 [1] : vector<8x16xf32> to vector<8xf32>
    %85 = vector.shape_cast %84 : vector<8xf32> to vector<8x1xf32>
    %cst_39 = arith.constant 1.600000e+01 : f32
    %86 = vector.broadcast %cst_39 : f32 to vector<8x1xf32>
    %87 = arith.divf %85, %86 : vector<8x1xf32>
    %88 = vector.broadcast %80 : vector<8x1xf32> to vector<8x16xf32>
    %89 = arith.subf %76, %88 : vector<8x16xf32>
    %cst_40 = arith.constant 9.99999974E-6 : f32
    %90 = vector.broadcast %cst_40 : f32 to vector<8x1xf32>
    %91 = arith.addf %87, %90 : vector<8x1xf32>
    %92 = math.rsqrt %91 : vector<8x1xf32>
    %93 = vector.broadcast %92 : vector<8x1xf32> to vector<8x16xf32>
    %94 = arith.mulf %89, %93 : vector<8x16xf32>
    %95 = arith.mulf %94, %26 : vector<8x16xf32>
    %96 = arith.addf %95, %29 : vector<8x16xf32>
    %c1_i32 = arith.constant 1 : i32
    %cst_41 = arith.constant dense<0.000000e+00> : vector<8x48xf32>
    %97 = tpu.matmul %96, %2, %cst_41 {dimension_numbers = #tpu.dot_dimension_numbers<[1], [0], [0], [1], [0, 0, 1, 1], [], []>} : vector<8x16xf32>, vector<16x48xf32>, vector<8x48xf32> -> vector<8x48xf32>
    %98 = arith.addf %97, %8 : vector<8x48xf32>
    %99 = vector.extract_strided_slice %98 {offsets = [0, 0], sizes = [8, 16], strides = [1, 1]} : vector<8x48xf32> to vector<8x16xf32>
    %100 = vector.extract_strided_slice %98 {offsets = [0, 16], sizes = [8, 16], strides = [1, 1]} : vector<8x48xf32> to vector<8x16xf32>
    %101 = vector.extract_strided_slice %98 {offsets = [0, 32], sizes = [8, 16], strides = [1, 1]} : vector<8x48xf32> to vector<8x16xf32>
    %cst_42 = arith.constant dense<0.000000e+00> : vector<8x8xf32>
    %102 = tpu.matmul %99, %100, %cst_42 {dimension_numbers = #tpu.dot_dimension_numbers<[1], [1], [0], [0], [0, 0, 1, 0], [], []>} : vector<8x16xf32>, vector<8x16xf32>, vector<8x8xf32> -> vector<8x8xf32>
    %cst_43 = arith.constant dense<0xFF800000> : vector<8xf32>
    %103 = vector.multi_reduction <maximumf>, %102, %cst_43 [1] : vector<8x8xf32> to vector<8xf32>
    %104 = vector.shape_cast %103 : vector<8xf32> to vector<8x1xf32>
    %105 = vector.broadcast %104 : vector<8x1xf32> to vector<8x8xf32>
    %106 = arith.subf %102, %105 : vector<8x8xf32>
    %107 = math.exp %106 : vector<8x8xf32>
    %cst_44 = arith.constant dense<0.000000e+00> : vector<8xf32>
    %108 = vector.multi_reduction <add>, %107, %cst_44 [1] : vector<8x8xf32> to vector<8xf32>
    %109 = vector.shape_cast %108 : vector<8xf32> to vector<8x1xf32>
    %110 = tpu.reciprocal %109 : vector<8x1xf32> -> vector<8x1xf32>
    %111 = vector.broadcast %110 : vector<8x1xf32> to vector<8x8xf32>
    %112 = arith.mulf %107, %111 : vector<8x8xf32>
    %cst_45 = arith.constant dense<0.000000e+00> : vector<8x16xf32>
    %113 = tpu.matmul %112, %101, %cst_45 {dimension_numbers = #tpu.dot_dimension_numbers<[1], [0], [0], [1], [0, 0, 1, 1], [], []>} : vector<8x8xf32>, vector<8x16xf32>, vector<8x16xf32> -> vector<8x16xf32>
    %cst_46 = arith.constant dense<0.000000e+00> : vector<8x16xf32>
    %114 = tpu.matmul %113, %3, %cst_46 {dimension_numbers = #tpu.dot_dimension_numbers<[1], [0], [0], [1], [0, 0, 1, 1], [], []>} : vector<8x16xf32>, vector<16x16xf32>, vector<8x16xf32> -> vector<8x16xf32>
    %115 = arith.addf %114, %11 : vector<8x16xf32>
    %116 = arith.addf %96, %115 : vector<8x16xf32>
    %cst_47 = arith.constant dense<0.000000e+00> : vector<8xf32>
    %117 = vector.multi_reduction <add>, %116, %cst_47 [1] : vector<8x16xf32> to vector<8xf32>
    %118 = vector.shape_cast %117 : vector<8xf32> to vector<8x1xf32>
    %cst_48 = arith.constant 1.600000e+01 : f32
    %119 = vector.broadcast %cst_48 : f32 to vector<8x1xf32>
    %120 = arith.divf %118, %119 : vector<8x1xf32>
    %121 = vector.broadcast %120 : vector<8x1xf32> to vector<8x16xf32>
    %122 = arith.subf %116, %121 : vector<8x16xf32>
    %123 = arith.mulf %122, %122 : vector<8x16xf32>
    %cst_49 = arith.constant dense<0.000000e+00> : vector<8xf32>
    %124 = vector.multi_reduction <add>, %123, %cst_49 [1] : vector<8x16xf32> to vector<8xf32>
    %125 = vector.shape_cast %124 : vector<8xf32> to vector<8x1xf32>
    %cst_50 = arith.constant 1.600000e+01 : f32
    %126 = vector.broadcast %cst_50 : f32 to vector<8x1xf32>
    %127 = arith.divf %125, %126 : vector<8x1xf32>
    %128 = vector.broadcast %120 : vector<8x1xf32> to vector<8x16xf32>
    %129 = arith.subf %116, %128 : vector<8x16xf32>
    %cst_51 = arith.constant 9.99999974E-6 : f32
    %130 = vector.broadcast %cst_51 : f32 to vector<8x1xf32>
    %131 = arith.addf %127, %130 : vector<8x1xf32>
    %132 = math.rsqrt %131 : vector<8x1xf32>
    %133 = vector.broadcast %132 : vector<8x1xf32> to vector<8x16xf32>
    %134 = arith.mulf %129, %133 : vector<8x16xf32>
    %135 = arith.mulf %134, %20 : vector<8x16xf32>
    %136 = arith.addf %135, %23 : vector<8x16xf32>
    %cst_52 = arith.constant dense<0.000000e+00> : vector<8x32xf32>
    %137 = tpu.matmul %136, %4, %cst_52 {dimension_numbers = #tpu.dot_dimension_numbers<[1], [0], [0], [1], [0, 0, 1, 1], [], []>} : vector<8x16xf32>, vector<16x32xf32>, vector<8x32xf32> -> vector<8x32xf32>
    %138 = arith.addf %137, %14 : vector<8x32xf32>
    %cst_53 = arith.constant 0.000000e+00 : f32
    %139 = vector.broadcast %cst_53 : f32 to vector<8x32xf32>
    %140 = arith.maximumf %138, %139 : vector<8x32xf32>
    %cst_54 = arith.constant dense<0.000000e+00> : vector<8x16xf32>
    %141 = tpu.matmul %140, %5, %cst_54 {dimension_numbers = #tpu.dot_dimension_numbers<[1], [0], [0], [1], [0, 0, 1, 1], [], []>} : vector<8x32xf32>, vector<32x16xf32>, vector<8x16xf32> -> vector<8x16xf32>
    %142 = arith.addf %141, %17 : vector<8x16xf32>
    %143 = arith.addf %136, %142 : vector<8x16xf32>
    %cst_55 = arith.constant dense<0.000000e+00> : vector<8xf32>
    %144 = vector.multi_reduction <add>, %143, %cst_55 [1] : vector<8x16xf32> to vector<8xf32>
    %145 = vector.shape_cast %144 : vector<8xf32> to vector<8x1xf32>
    %cst_56 = arith.constant 1.600000e+01 : f32
    %146 = vector.broadcast %cst_56 : f32 to vector<8x1xf32>
    %147 = arith.divf %145, %146 : vector<8x1xf32>
    %148 = vector.broadcast %147 : vector<8x1xf32> to vector<8x16xf32>
    %149 = arith.subf %143, %148 : vector<8x16xf32>
    %150 = arith.mulf %149, %149 : vector<8x16xf32>
    %cst_57 = arith.constant dense<0.000000e+00> : vector<8xf32>
    %151 = vector.multi_reduction <add>, %150, %cst_57 [1] : vector<8x16xf32> to vector<8xf32>
    %152 = vector.shape_cast %151 : vector<8xf32> to vector<8x1xf32>
    %cst_58 = arith.constant 1.600000e+01 : f32
    %153 = vector.broadcast %cst_58 : f32 to vector<8x1xf32>
    %154 = arith.divf %152, %153 : vector<8x1xf32>
    %155 = vector.broadcast %147 : vector<8x1xf32> to vector<8x16xf32>
    %156 = arith.subf %143, %155 : vector<8x16xf32>
    %cst_59 = arith.constant 9.99999974E-6 : f32
    %157 = vector.broadcast %cst_59 : f32 to vector<8x1xf32>
    %158 = arith.addf %154, %157 : vector<8x1xf32>
    %159 = math.rsqrt %158 : vector<8x1xf32>
    %160 = vector.broadcast %159 : vector<8x1xf32> to vector<8x16xf32>
    %161 = arith.mulf %156, %160 : vector<8x16xf32>
    %162 = arith.mulf %161, %26 : vector<8x16xf32>
    %163 = arith.addf %162, %29 : vector<8x16xf32>
    %c0_60 = arith.constant 0 : index
    %c0_61 = arith.constant 0 : index
    %c0_62 = arith.constant 0 : index
    %164 = vector.load %arg9[%c0_60, %c0_61, %c0_62] : memref<1x8x16xf32, #tpu.memory_space<vmem>>, vector<1x8x16xf32>
    %165 = vector.shape_cast %164 : vector<1x8x16xf32> to vector<8x16xf32>
    %166 = vector.shape_cast %163 : vector<8x16xf32> to vector<1x8x16xf32>
    tpu.vector_store %arg9[%c0_60, %c0_61, %c0_62], %166 {strides = array<i32>} : memref<1x8x16xf32, #tpu.memory_space<vmem>>, vector<1x8x16xf32>,
    return
  }
  func.func @transform_0(%arg0: i32) -> (i32, i32, i32) {
    %c0_i32 = arith.constant 0 : i32
    %c0_i32_0 = arith.constant 0 : i32
    %c0_i32_1 = arith.constant 0 : i32
    return %arg0, %c0_i32, %c0_i32_0 : i32, i32, i32
  }
  func.func @transform_1(%arg0: i32) -> (i32, i32) {
    %c0_i32 = arith.constant 0 : i32
    %c0_i32_0 = arith.constant 0 : i32
    %c0_i32_1 = arith.constant 0 : i32
    return %c0_i32, %c0_i32_0 : i32, i32
  }
  func.func @transform_2(%arg0: i32) -> (i32, i32) {
    %c0_i32 = arith.constant 0 : i32
    %c0_i32_0 = arith.constant 0 : i32
    %c0_i32_1 = arith.constant 0 : i32
    return %c0_i32, %c0_i32_0 : i32, i32
  }
  func.func @transform_3(%arg0: i32) -> (i32, i32) {
    %c0_i32 = arith.constant 0 : i32
    %c0_i32_0 = arith.constant 0 : i32
    %c0_i32_1 = arith.constant 0 : i32
    return %c0_i32, %c0_i32_0 : i32, i32
  }
  func.func @transform_4(%arg0: i32) -> (i32, i32) {
    %c0_i32 = arith.constant 0 : i32
    %c0_i32_0 = arith.constant 0 : i32
    %c0_i32_1 = arith.constant 0 : i32
    return %c0_i32, %c0_i32_0 : i32, i32
  }
  func.func @transform_5(%arg0: i32) -> (i32, i32) {
    %c0_i32 = arith.constant 0 : i32
    %c0_i32_0 = arith.constant 0 : i32
    %c0_i32_1 = arith.constant 0 : i32
    return %c0_i32, %c0_i32_0 : i32, i32
  }
  func.func @transform_6(%arg0: i32) -> (i32, i32) {
    %c0_i32 = arith.constant 0 : i32
    %c0_i32_0 = arith.constant 0 : i32
    %c0_i32_1 = arith.constant 0 : i32
    return %c0_i32, %c0_i32_0 : i32, i32
  }
  func.func @transform_7(%arg0: i32) -> (i32, i32) {
    %c0_i32 = arith.constant 0 : i32
    %c0_i32_0 = arith.constant 0 : i32
    %c0_i32_1 = arith.constant 0 : i32
    return %c0_i32, %c0_i32_0 : i32, i32
  }
  func.func @transform_8(%arg0: i32) -> (i32, i32, i32) {
    %c0_i32 = arith.constant 0 : i32
    %c0_i32_0 = arith.constant 0 : i32
    %c0_i32_1 = arith.constant 0 : i32
    return %arg0, %c0_i32, %c0_i32_0 : i32, i32, i32
  }
}

</mosaic_0001>

<llo_original>
// kernel: tpu_custom_call.1
$region0: #{tpu_custom_call.1}
  #allocation0 [shape = 'u32[]', space=smem, size = 0x4, offset = 0x4, fixed_abs, tag = 'smem constant byte address 0x4 - core index']
  #allocation1 [shape = 'u32[144,128]{1,0:T(1,128)}', space=vmem, size = 0x12000, scoped, tag = 'internal scratch']
  %s0 = inlined_call_operand.hbm [shape: f32[2,8,16], index: 0, kind: input, shape index: {}, may-alias: {0,8}]
  %s1 = inlined_call_operand.vmem [shape: f32[16,48], index: 1, kind: input, shape index: {}]
  %s2 = inlined_call_operand.vmem [shape: f32[1,48], index: 2, kind: input, shape index: {}]
  %s3 = inlined_call_operand.vmem [shape: f32[16,16], index: 3, kind: input, shape index: {}]
  %s4 = inlined_call_operand.vmem [shape: f32[16,32], index: 4, kind: input, shape index: {}]
  %s5 = inlined_call_operand.vmem [shape: f32[32,16], index: 5, kind: input, shape index: {}]
  %s6 = inlined_call_operand.vmem [shape: f32[3,32], index: 6, kind: input, shape index: {}]
  %s7 = inlined_call_operand.vmem [shape: f32[4,16], index: 7, kind: input, shape index: {}]
  %s8 = inlined_call_operand.hbm [shape: f32[2,8,16], index: 8, kind: output, shape index: {}, may-alias: {0,8}]
  %s9 = sld [smem:[#allocation0]]
  $region69: #{tpu_custom_call.1} parent=0
    _
  %s11 = ssub.s32 1, %s9
  %s12 = scalar_select 0, %s11, %s9
  $region1: #{tpu_custom_call.1} parent=0
    #allocation2 [shape = 'u8[8192]{0}', space=vmem, size = 0x2000, scoped, tag = 'input window, operand 0']
    #allocation3 [shape = 's32[2]{0}', space=sflag, size = 0x8, scoped, tag = 'scoped memory for tpu_custom_call.1']
    #allocation4 [shape = 's32[2]{0}', space=sflag, size = 0x8, scoped, tag = 'scoped memory for tpu_custom_call.1']
    #allocation5 [shape = 'u8[8192]{0}', space=vmem, size = 0x2000, scoped, tag = 'output window, operand 0']
    %13 = vsyncpa [#allocation3], 0
    %s14 = scalar_lea.sflag [#allocation3], 1
    %15 = vsyncpa %s14, 0
    %16 = vsyncpa [#allocation4], 0
    %s17 = scalar_lea.sflag [#allocation4], 1
    %18 = vsyncpa %s17, 0
    loop: start=0, step=1, limit=4
    $region2: #{tpu_custom_call.1} parent=1 // loop_pre_header
      _
    $region3: #{tpu_custom_call.1} parent=1 // loop_header
      %s20 = sphi 0, %s24
      %p21 = scmp.ge.s32.totalorder %s20, 4
      %s30 = sphi 0, %s32
      %s33 = sphi 0, %s30
      %s34 = sphi 0, %s33
      %s50 = sphi 0, %s34
      %s54 = sphi 0, %s54
      %s56 = sphi 0, %s54
      %s57 = sphi 0, %s56
      %s71 = sphi 0, %s57
      %s75 = sphi 0, %s75
      %s77 = sphi 0, %s75
      %s78 = sphi 0, %s77
      %s92 = sphi 0, %s78
      %s96 = sphi 0, %s96
      %s98 = sphi 0, %s96
      %s99 = sphi 0, %s98
      %s113 = sphi 0, %s99
      %s117 = sphi 0, %s117
      %s119 = sphi 0, %s117
      %s120 = sphi 0, %s119
      %s134 = sphi 0, %s120
      %s138 = sphi 0, %s138
      %s140 = sphi 0, %s138
      %s141 = sphi 0, %s140
      %s155 = sphi 0, %s141
      %s159 = sphi 0, %s159
      %s161 = sphi 0, %s159
      %s162 = sphi 0, %s161
      %s176 = sphi 0, %s162
      %s180 = sphi 0, %s180
      %s182 = sphi 0, %s180
      %s183 = sphi 0, %s182
      %s197 = sphi 0, %s183
      %s203 = sphi 0, %s205
      %s206 = sphi 0, %s203
      %s207 = sphi 0, %s206
      %s223 = sphi 0, %s207
    $region4: #{tpu_custom_call.1} parent=1 // loop_header_branch
      %23 = sbr.rel (%p21) target = $region8
    $region5: #{tpu_custom_call.1} parent=1 // loop_body
      %s25 = ssub.s32 %s20, 1
      %s26 = ssub.s32 %s20, 2
      %s27 = sadd.s32 %s20, 1
      %s28 = ssub.s32 %s20, %s27
      %p29 = scmp.eq.s32.totalorder %s28, 0
      %s31 = sadd.s32 %s30, 1
      %s32 = scalar_select %p29, %s30, %s31
      %p35 = pneg %p29
      %p36 = scmp.eq.s32.totalorder %s20, 1
      %p37 = por %p35, %p36
      %p38 = scmp.ne.s32.totalorder %s30, %s33
      %p39 = scmp.eq.s32.totalorder %s20, 0
      %p40 = por %p38, %p39
      %p41 = scmp.ne.s32.totalorder %s30, %s33
      %p42 = scmp.eq.s32.totalorder %s25, 1
      %p43 = por %p41, %p42
      %p44 = scmp.ne.s32.totalorder %s33, %s34
      %p45 = scmp.eq.s32.totalorder %s25, 0
      %p46 = por %p44, %p45
      %p47 = scmp.ne.s32.totalorder %s33, %s34
      %p48 = scmp.eq.s32.totalorder %s26, 1
      %p49 = por %p47, %p48
      %p51 = scmp.ne.s32.totalorder %s34, %s50
      %p52 = scmp.eq.s32.totalorder %s26, 0
      %p53 = por %p51, %p52
      %s55 = sadd.s32 %s54, 1
      %p58 = scmp.eq.s32.totalorder %s20, 1
      %p59 = scmp.ne.s32.totalorder %s54, %s56
      %p60 = scmp.eq.s32.totalorder %s20, 0
      %p61 = por %p59, %p60
      %p62 = scmp.ne.s32.totalorder %s54, %s56
      %p63 = scmp.eq.s32.totalorder %s25, 1
      %p64 = por %p62, %p63
      %p65 = scmp.ne.s32.totalorder %s56, %s57
      %p66 = scmp.eq.s32.totalorder %s25, 0
      %p67 = por %p65, %p66
      %p68 = scmp.ne.s32.totalorder %s56, %s57
      %p69 = scmp.eq.s32.totalorder %s26, 1
      %p70 = por %p68, %p69
      %p72 = scmp.ne.s32.totalorder %s57, %s71
      %p73 = scmp.eq.s32.totalorder %s26, 0
      %p74 = por %p72, %p73
      %s76 = sadd.s32 %s75, 1
      %p79 = scmp.eq.s32.totalorder %s20, 1
      %p80 = scmp.ne.s32.totalorder %s75, %s77
      %p81 = scmp.eq.s32.totalorder %s20, 0
      %p82 = por %p80, %p81
      %p83 = scmp.ne.s32.totalorder %s75, %s77
      %p84 = scmp.eq.s32.totalorder %s25, 1
      %p85 = por %p83, %p84
      %p86 = scmp.ne.s32.totalorder %s77, %s78
      %p87 = scmp.eq.s32.totalorder %s25, 0
      %p88 = por %p86, %p87
      %p89 = scmp.ne.s32.totalorder %s77, %s78
      %p90 = scmp.eq.s32.totalorder %s26, 1
      %p91 = por %p89, %p90
      %p93 = scmp.ne.s32.totalorder %s78, %s92
      %p94 = scmp.eq.s32.totalorder %s26, 0
      %p95 = por %p93, %p94
      %s97 = sadd.s32 %s96, 1
      %p100 = scmp.eq.s32.totalorder %s20, 1
      %p101 = scmp.ne.s32.totalorder %s96, %s98
      %p102 = scmp.eq.s32.totalorder %s20, 0
      %p103 = por %p101, %p102
      %p104 = scmp.ne.s32.totalorder %s96, %s98
      %p105 = scmp.eq.s32.totalorder %s25, 1
      %p106 = por %p104, %p105
      %p107 = scmp.ne.s32.totalorder %s98, %s99
      %p108 = scmp.eq.s32.totalorder %s25, 0
      %p109 = por %p107, %p108
      %p110 = scmp.ne.s32.totalorder %s98, %s99
      %p111 = scmp.eq.s32.totalorder %s26, 1
      %p112 = por %p110, %p111
      %p114 = scmp.ne.s32.totalorder %s99, %s113
      %p115 = scmp.eq.s32.totalorder %s26, 0
      %p116 = por %p114, %p115
      %s118 = sadd.s32 %s117, 1
      %p121 = scmp.eq.s32.totalorder %s20, 1
      %p122 = scmp.ne.s32.totalorder %s117, %s119
      %p123 = scmp.eq.s32.totalorder %s20, 0
      %p124 = por %p122, %p123
      %p125 = scmp.ne.s32.totalorder %s117, %s119
      %p126 = scmp.eq.s32.totalorder %s25, 1
      %p127 = por %p125, %p126
      %p128 = scmp.ne.s32.totalorder %s119, %s120
      %p129 = scmp.eq.s32.totalorder %s25, 0
      %p130 = por %p128, %p129
      %p131 = scmp.ne.s32.totalorder %s119, %s120
      %p132 = scmp.eq.s32.totalorder %s26, 1
      %p133 = por %p131, %p132
      %p135 = scmp.ne.s32.totalorder %s120, %s134
      %p136 = scmp.eq.s32.totalorder %s26, 0
      %p137 = por %p135, %p136
      %s139 = sadd.s32 %s138, 1
      %p142 = scmp.eq.s32.totalorder %s20, 1
      %p143 = scmp.ne.s32.totalorder %s138, %s140
      %p144 = scmp.eq.s32.totalorder %s20, 0
      %p145 = por %p143, %p144
      %p146 = scmp.ne.s32.totalorder %s138, %s140
      %p147 = scmp.eq.s32.totalorder %s25, 1
      %p148 = por %p146, %p147
      %p149 = scmp.ne.s32.totalorder %s140, %s141
      %p150 = scmp.eq.s32.totalorder %s25, 0
      %p151 = por %p149, %p150
      %p152 = scmp.ne.s32.totalorder %s140, %s141
      %p153 = scmp.eq.s32.totalorder %s26, 1
      %p154 = por %p152, %p153
      %p156 = scmp.ne.s32.totalorder %s141, %s155
      %p157 = scmp.eq.s32.totalorder %s26, 0
      %p158 = por %p156, %p157
      %s160 = sadd.s32 %s159, 1
      %p163 = scmp.eq.s32.totalorder %s20, 1
      %p164 = scmp.ne.s32.totalorder %s159, %s161
      %p165 = scmp.eq.s32.totalorder %s20, 0
      %p166 = por %p164, %p165
      %p167 = scmp.ne.s32.totalorder %s159, %s161
      %p168 = scmp.eq.s32.totalorder %s25, 1
      %p169 = por %p167, %p168
      %p170 = scmp.ne.s32.totalorder %s161, %s162
      %p171 = scmp.eq.s32.totalorder %s25, 0
      %p172 = por %p170, %p171
      %p173 = scmp.ne.s32.totalorder %s161, %s162
      %p174 = scmp.eq.s32.totalorder %s26, 1
      %p175 = por %p173, %p174
      %p177 = scmp.ne.s32.totalorder %s162, %s176
      %p178 = scmp.eq.s32.totalorder %s26, 0
      %p179 = por %p177, %p178
      %s181 = sadd.s32 %s180, 1
      %p184 = scmp.eq.s32.totalorder %s20, 1
      %p185 = scmp.ne.s32.totalorder %s180, %s182
      %p186 = scmp.eq.s32.totalorder %s20, 0
      %p187 = por %p185, %p186
      %p188 = scmp.ne.s32.totalorder %s180, %s182
      %p189 = scmp.eq.s32.totalorder %s25, 1
      %p190 = por %p188, %p189
      %p191 = scmp.ne.s32.totalorder %s182, %s183
      %p192 = scmp.eq.s32.totalorder %s25, 0
      %p193 = por %p191, %p192
      %p194 = scmp.ne.s32.totalorder %s182, %s183
      %p195 = scmp.eq.s32.totalorder %s26, 1
      %p196 = por %p194, %p195
      %p198 = scmp.ne.s32.totalorder %s183, %s197
      %p199 = scmp.eq.s32.totalorder %s26, 0
      %p200 = por %p198, %p199
      %s201 = ssub.s32 %s20, %s27
      %p202 = scmp.eq.s32.totalorder %s201, 0
      %s204 = sadd.s32 %s203, 1
      %s205 = scalar_select %p202, %s203, %s204
      %p208 = pneg %p202
      %p209 = scmp.eq.s32.totalorder %s20, 1
      %p210 = por %p208, %p209
      %p211 = scmp.ne.s32.totalorder %s203, %s206
      %p212 = scmp.eq.s32.totalorder %s20, 0
      %p213 = por %p211, %p212
      %p214 = scmp.ne.s32.totalorder %s203, %s206
      %p215 = scmp.eq.s32.totalorder %s25, 1
      %p216 = por %p214, %p215
      %p217 = scmp.ne.s32.totalorder %s206, %s207
      %p218 = scmp.eq.s32.totalorder %s25, 0
      %p219 = por %p217, %p218
      %p220 = scmp.ne.s32.totalorder %s206, %s207
      %p221 = scmp.eq.s32.totalorder %s26, 1
      %p222 = por %p220, %p221
      %p224 = scmp.ne.s32.totalorder %s207, %s223
      %p225 = scmp.eq.s32.totalorder %s26, 0
      %p226 = por %p224, %p225
      %p227 = scmp.le.s32.totalorder 1, %s20
      %p228 = scmp.lt.s32.totalorder %s20, 3
      %p229 = pnand %p227, %p228
      %p230 = pneg %p229
      // Predicated region
      $region9: #{tpu_custom_call.1} parent=5 // pred_check
        _
      $region10: #{tpu_custom_call.1} parent=5 // pred_check_branch
        %232 = sbr.rel (%p229) target = $region12
      $region11: #{tpu_custom_call.1} parent=5 // pred_region
        %s233 = ssub.s32 %s20, 1
        // Predicated region
        $region13: #{tpu_custom_call.1} parent=11 // pred_check
          %p234 = pneg %p67
        $region14: #{tpu_custom_call.1} parent=11 // pred_check_branch
          %236 = sbr.rel (%p234) target = $region16
        $region15: #{tpu_custom_call.1} parent=11 // pred_region
          _
        $region16: #{tpu_custom_call.1} parent=11 // pred_fallthru
          _
        // Predicated region
        $region17: #{tpu_custom_call.1} parent=11 // pred_check
          %p237 = pneg %p88
        $region18: #{tpu_custom_call.1} parent=11 // pred_check_branch
          %239 = sbr.rel (%p237) target = $region20
        $region19: #{tpu_custom_call.1} parent=11 // pred_region
          _
        $region20: #{tpu_custom_call.1} parent=11 // pred_fallthru
          _
        // Predicated region
        $region21: #{tpu_custom_call.1} parent=11 // pred_check
          %p240 = pneg %p109
        $region22: #{tpu_custom_call.1} parent=11 // pred_check_branch
          %242 = sbr.rel (%p240) target = $region24
        $region23: #{tpu_custom_call.1} parent=11 // pred_region
          _
        $region24: #{tpu_custom_call.1} parent=11 // pred_fallthru
          _
        // Predicated region
        $region25: #{tpu_custom_call.1} parent=11 // pred_check
          %p243 = pneg %p130
        $region26: #{tpu_custom_call.1} parent=11 // pred_check_branch
          %245 = sbr.rel (%p243) target = $region28
        $region27: #{tpu_custom_call.1} parent=11 // pred_region
          _
        $region28: #{tpu_custom_call.1} parent=11 // pred_fallthru
          _
        // Predicated region
        $region29: #{tpu_custom_call.1} parent=11 // pred_check
          %p246 = pneg %p151
        $region30: #{tpu_custom_call.1} parent=11 // pred_check_branch
          %248 = sbr.rel (%p246) target = $region32
        $region31: #{tpu_custom_call.1} parent=11 // pred_region
          _
        $region32: #{tpu_custom_call.1} parent=11 // pred_fallthru
          _
        // Predicated region
        $region33: #{tpu_custom_call.1} parent=11 // pred_check
          %p249 = pneg %p172
        $region34: #{tpu_custom_call.1} parent=11 // pred_check_branch
          %251 = sbr.rel (%p249) target = $region36
        $region35: #{tpu_custom_call.1} parent=11 // pred_region
          _
        $region36: #{tpu_custom_call.1} parent=11 // pred_fallthru
          _
        // Predicated region
        $region37: #{tpu_custom_call.1} parent=11 // pred_check
          %p252 = pneg %p193
        $region38: #{tpu_custom_call.1} parent=11 // pred_check_branch
          %254 = sbr.rel (%p252) target = $region40
        $region39: #{tpu_custom_call.1} parent=11 // pred_region
          _
        $region40: #{tpu_custom_call.1} parent=11 // pred_fallthru
          _
      $region12: #{tpu_custom_call.1} parent=5 // pred_fallthru
        _
      %p255 = scmp.lt.s32.totalorder %s20, 2
      // Predicated region
      $region41: #{tpu_custom_call.1} parent=5 // pred_check
        %p256 = pneg %p255
      $region42: #{tpu_custom_call.1} parent=5 // pred_check_branch
        %258 = sbr.rel (%p256) target = $region44
      $region43: #{tpu_custom_call.1} parent=5 // pred_region
        // Predicated region
        $region45: #{tpu_custom_call.1} parent=43 // pred_check
          %p259 = pneg %p40
        $region46: #{tpu_custom_call.1} parent=43 // pred_check_branch
          %261 = sbr.rel (%p259) target = $region48
        $region47: #{tpu_custom_call.1} parent=43 // pred_region
          %s262 = sand.u32 %s30, 1
          %s263 = scalar_lea.sflag [#allocation3], %s262
          %s264 = sand.u32 %s30, 1
          %s265 = smul.addr %s264, 8
          %s266 = scalar_lea.vmem [#allocation2], %s265
          %s268 = ssub.s32 128, 128
          %269 = vsyncadd %s263, %s268
          %s270 = smul.addr %s20, 128
          %s271 = scalar_lea.hbm %s0, %s270
          %s273 = sshll.u32 %s266, 4
          %s274 = int_to_ptr.vmem [resolvable:$true] %s273
          %276 = dma.hbm_to_vmem [thread:$0]  %s271, 128, %s274, %s263
        $region48: #{tpu_custom_call.1} parent=43 // pred_fallthru
          _
      $region44: #{tpu_custom_call.1} parent=5 // pred_fallthru
        _
      %p277 = scmp.le.s32.totalorder 1, %s20
      %p278 = scmp.lt.s32.totalorder %s20, 3
      %p279 = pnand %p277, %p278
      %p280 = pneg %p279
      // Predicated region
      $region49: #{tpu_custom_call.1} parent=5 // pred_check
        _
      $region50: #{tpu_custom_call.1} parent=5 // pred_check_branch
        %282 = sbr.rel (%p279) target = $region52
      $region51: #{tpu_custom_call.1} parent=5 // pred_region
        %s283 = ssub.s32 %s20, 1
        %s284 = sand.u32 %s33, 1
        %s285 = scalar_lea.sflag [#allocation3], %s284
        %s286 = sand.u32 %s33, 1
        %s287 = smul.addr %s286, 8
        %s288 = scalar_lea.vmem [#allocation2], %s287
        // Predicated region
        $region53: #{tpu_custom_call.1} parent=51 // pred_check
          %p289 = pneg %p46
        $region54: #{tpu_custom_call.1} parent=51 // pred_check_branch
          %291 = sbr.rel (%p289) target = $region56
        $region55: #{tpu_custom_call.1} parent=51 // pred_region
          %292 = dma.done %s285, 128
        $region56: #{tpu_custom_call.1} parent=51 // pred_fallthru
          _
        %s293 = sand.u32 %s33, 1
        %s294 = scalar_lea.sflag [#allocation3], %s293
        %s295 = sand.u32 %s33, 1
        %s296 = smul.addr %s295, 8
        %s297 = scalar_lea.vmem [#allocation2], %s296
        %p298 = pneg %p46
        %p299 = pneg %p43
        %p300 = pneg %p67
        %p301 = pneg %p64
        %p302 = pneg %p88
        %p303 = pneg %p85
        %p304 = pneg %p109
        %p305 = pneg %p106
        %p306 = pneg %p130
        %p307 = pneg %p127
        %p308 = pneg %p151
        %p309 = pneg %p148
        %p310 = pneg %p172
        %p311 = pneg %p169
        %p312 = pneg %p193
        %p313 = pneg %p190
        %p314 = pneg %p219
        %p315 = pneg %p216
        %s316 = sand.u32 %s206, 1
        %s317 = scalar_lea.sflag [#allocation4], %s316
        %s318 = sand.u32 %s206, 1
        %s319 = smul.addr %s318, 8
        %s320 = scalar_lea.vmem [#allocation5], %s319
        %v321 = vld [vmem:[%s288] sm:$0xff]
        %v322 = vld [vmem:[%s1] sm:$0xff]
        %v323 = vld [vmem:[%s1 + $0x8] sm:$0xff]
        %v324 = vld [vmem:[%s3] sm:$0xff]
        %v325 = vld [vmem:[%s3 + $0x8] sm:$0xff]
        %v326 = vld [vmem:[%s4] sm:$0xff]
        %v327 = vld [vmem:[%s4 + $0x8] sm:$0xff]
        %v328 = vld [vmem:[%s5] sm:$0xff]
        %v329 = vld [vmem:[%s5 + $0x8] sm:$0xff]
        %v330 = vld [vmem:[%s5 + $0x10] sm:$0xff]
        %v331 = vld [vmem:[%s5 + $0x18] sm:$0xff]
        %v332 = vld [vmem:[%s2] sm:$0x1]
        %v334 = vlaneseq
        %v335 = vshrl.u32 %v334, 7
        %v336 = vsub.s32 0, %v335
        %v337 = vrot.slane %v332, %v336
        %v339 = vld [vmem:[%s6] sm:$0x1]
        %v340 = vlaneseq
        %v341 = vshrl.u32 %v340, 7
        %v342 = vsub.s32 0, %v341
        %v343 = vrot.slane %v339, %v342
        %v344 = vld [vmem:[%s6 + $0x1] sm:$0x1]
        %v345 = vlaneseq
        %v346 = vshrl.u32 %v345, 7
        %v347 = vsub.s32 0, %v346
        %v348 = vrot.slane %v344, %v347
        %v349 = vld [vmem:[%s6 + $0x2] sm:$0x1]
        %v350 = vlaneseq
        %v351 = vshrl.u32 %v350, 7
        %v352 = vsub.s32 0, %v351
        %v353 = vrot.slane %v349, %v352
        %v354 = vld [vmem:[%s7] sm:$0x1]
        %v355 = vlaneseq
        %v356 = vshrl.u32 %v355, 7
        %v357 = vsub.s32 0, %v356
        %v358 = vrot.slane %v354, %v357
        %v359 = vld [vmem:[%s7 + $0x1] sm:$0x1]
        %v360 = vlaneseq
        %v361 = vshrl.u32 %v360, 7
        %v362 = vsub.s32 0, %v361
        %v363 = vrot.slane %v359, %v362
        %v364 = vld [vmem:[%s7 + $0x2] sm:$0x1]
        %v365 = vlaneseq
        %v366 = vshrl.u32 %v365, 7
        %v367 = vsub.s32 0, %v366
        %v368 = vrot.slane %v364, %v367
        %v369 = vld [vmem:[%s7 + $0x3] sm:$0x1]
        %v370 = vlaneseq
        %v371 = vshrl.u32 %v370, 7
        %v372 = vsub.s32 0, %v371
        %v373 = vrot.slane %v369, %v372
        %vm374 = vcmask 130048
        %v376 = vsel %vm374, %v321, 0
        %378 = vmatprep.subr.mxu0 0.0
        %379 = vmatpush1.msra.mxu0 %v322
        %380 = vmatprep.subr.mxu0 0.0
        %381 = vmatpush1.msra.mxu0 %v323
        %382 = vmatprep.subr.mxu0 0.0
        %383 = vmatpush1.msra.mxu0 0.0
        %384 = vmatprep.subr.mxu0 0.0
        %385 = vmatpush1.msra.mxu0 0.0
        %386 = vmatprep.subr.mxu0 0.0
        %387 = vmatpush1.msra.mxu0 0.0
        %388 = vmatprep.subr.mxu0 0.0
        %389 = vmatpush1.msra.mxu0 0.0
        %390 = vmatprep.subr.mxu0 0.0
        %391 = vmatpush1.msra.mxu0 0.0
        %392 = vmatprep.subr.mxu0 0.0
        %393 = vmatpush1.msra.mxu0 0.0
        %394 = vmatprep.subr.mxu0 0.0
        %395 = vmatpush1.msra.mxu0 0.0
        %396 = vmatprep.subr.mxu0 0.0
        %397 = vmatpush1.msra.mxu0 0.0
        %398 = vmatprep.subr.mxu0 0.0
        %399 = vmatpush1.msra.mxu0 0.0
        %400 = vmatprep.subr.mxu0 0.0
        %401 = vmatpush1.msra.mxu0 0.0
        %402 = vmatprep.subr.mxu0 0.0
        %403 = vmatpush1.msra.mxu0 0.0
        %404 = vmatprep.subr.mxu0 0.0
        %405 = vmatpush1.msra.mxu0 0.0
        %406 = vmatprep.subr.mxu0 0.0
        %407 = vmatpush1.msra.mxu0 0.0
        %408 = vmatprep.subr.mxu0 0.0
        %409 = vmatpush1.msra.mxu0 0.0
        %410 = vmatprep.subr.mxu0 0.0
        %411 = vmatpush1.msra.mxu0 0.0
        %412 = vmatprep.subr.mxu0 0.0
        %413 = vmatpush1.msra.mxu0 0.0
        %414 = vmatprep.subr.mxu0 0.0
        %415 = vmatpush1.msra.mxu0 0.0
        %416 = vmatprep.subr.mxu0 0.0
        %417 = vmatpush1.msra.mxu0 0.0
        %418 = vmatprep.subr.mxu0 0.0
        %419 = vmatpush1.msra.mxu0 0.0
        %420 = vmatprep.subr.mxu0 0.0
        %421 = vmatpush1.msra.mxu0 0.0
        %422 = vmatprep.subr.mxu0 0.0
        %423 = vmatpush1.msra.mxu0 0.0
        %424 = vmatprep.subr.mxu0 0.0
        %425 = vmatpush1.msra.mxu0 0.0
        %426 = vmatprep.subr.mxu0 0.0
        %427 = vmatpush1.msra.mxu0 0.0
        %428 = vmatprep.subr.mxu0 0.0
        %429 = vmatpush1.msra.mxu0 0.0
        %430 = vmatprep.subr.mxu0 0.0
        %431 = vmatpush1.msra.mxu0 0.0
        %432 = vmatprep.subr.mxu0 0.0
        %433 = vmatpush1.msra.mxu0 0.0
        %434 = vmatprep.subr.mxu0 0.0
        %435 = vmatpush1.msra.mxu0 0.0
        %436 = vmatprep.subr.mxu0 0.0
        %437 = vmatpush1.msra.mxu0 0.0
        %438 = vmatprep.subr.mxu0 0.0
        %439 = vmatpush1.msra.mxu0 0.0
        %440 = vmatprep.subr.mxu0 0.0
        %441 = vmatpush1.msra.mxu0 0.0
        %442 = vmatprep.mubr.f32.mxu0 0.0
        %443 = vmatmul.mubr.f32.gmra.mrb[0].mxu0 %v376
        %v444 = vpop.f32.mrb[0].mxu0
        %v445 = vadd.f32 %v337, %v444
        %v446 = vpop.f32.mrb[0].mxu0
        %447 = vdwg.mxu0
        %449 = vrot.lane.b32.xlu0 %v445, 112
        %v450 = vpop.permute.xlu0 %449
        %v451 = vsel %vm374, %v445, 0
        %v453 = vsel %vm374, %v450, 0
        %455 = vmatprep.subr.mxu0 0.0
        %456 = vmatpush1.xpose.msra.mxu0 %v453
        %457 = vmatprep.subr.mxu0 0.0
        %458 = vmatpush1.xpose.msra.mxu0 0.0
        %459 = vmatprep.subr.mxu0 0.0
        %460 = vmatpush1.xpose.msra.mxu0 0.0
        %461 = vmatprep.subr.mxu0 0.0
        %462 = vmatpush1.xpose.msra.mxu0 0.0
        %463 = vmatprep.subr.mxu0 0.0
        %464 = vmatpush1.xpose.msra.mxu0 0.0
        %465 = vmatprep.subr.mxu0 0.0
        %466 = vmatpush1.xpose.msra.mxu0 0.0
        %467 = vmatprep.subr.mxu0 0.0
        %468 = vmatpush1.xpose.msra.mxu0 0.0
        %469 = vmatprep.subr.mxu0 0.0
        %470 = vmatpush1.xpose.msra.mxu0 0.0
        %471 = vmatprep.subr.mxu0 0.0
        %472 = vmatpush1.xpose.msra.mxu0 0.0
        %473 = vmatprep.subr.mxu0 0.0
        %474 = vmatpush1.xpose.msra.mxu0 0.0
        %475 = vmatprep.subr.mxu0 0.0
        %476 = vmatpush1.xpose.msra.mxu0 0.0
        %477 = vmatprep.subr.mxu0 0.0
        %478 = vmatpush1.xpose.msra.mxu0 0.0
        %479 = vmatprep.subr.mxu0 0.0
        %480 = vmatpush1.xpose.msra.mxu0 0.0
        %481 = vmatprep.subr.mxu0 0.0
        %482 = vmatpush1.xpose.msra.mxu0 0.0
        %483 = vmatprep.subr.mxu0 0.0
        %484 = vmatpush1.xpose.msra.mxu0 0.0
        %485 = vmatprep.subr.mxu0 0.0
        %486 = vmatpush1.xpose.msra.mxu0 0.0
        %487 = vmatprep.subr.mxu0 0.0
        %488 = vmatpush1.xpose.msra.mxu0 0.0
        %489 = vmatprep.subr.mxu0 0.0
        %490 = vmatpush1.xpose.msra.mxu0 0.0
        %491 = vmatprep.subr.mxu0 0.0
        %492 = vmatpush1.xpose.msra.mxu0 0.0
        %493 = vmatprep.subr.mxu0 0.0
        %494 = vmatpush1.xpose.msra.mxu0 0.0
        %495 = vmatprep.subr.mxu0 0.0
        %496 = vmatpush1.xpose.msra.mxu0 0.0
        %497 = vmatprep.subr.mxu0 0.0
        %498 = vmatpush1.xpose.msra.mxu0 0.0
        %499 = vmatprep.subr.mxu0 0.0
        %500 = vmatpush1.xpose.msra.mxu0 0.0
        %501 = vmatprep.subr.mxu0 0.0
        %502 = vmatpush1.xpose.msra.mxu0 0.0
        %503 = vmatprep.subr.mxu0 0.0
        %504 = vmatpush1.xpose.msra.mxu0 0.0
        %505 = vmatprep.subr.mxu0 0.0
        %506 = vmatpush1.xpose.msra.mxu0 0.0
        %507 = vmatprep.subr.mxu0 0.0
        %508 = vmatpush1.xpose.msra.mxu0 0.0
        %509 = vmatprep.subr.mxu0 0.0
        %510 = vmatpush1.xpose.msra.mxu0 0.0
        %511 = vmatprep.subr.mxu0 0.0
        %512 = vmatpush1.xpose.msra.mxu0 0.0
        %513 = vmatprep.subr.mxu0 0.0
        %514 = vmatpush1.xpose.msra.mxu0 0.0
        %515 = vmatprep.subr.mxu0 0.0
        %516 = vmatpush1.xpose.msra.mxu0 0.0
        %517 = vmatprep.subr.mxu0 0.0
        %518 = vmatpush1.xpose.msra.mxu0 0.0
        %519 = vmatprep.mubr.f32.mxu0 0.0
        %520 = vmatmul.mubr.f32.gmra.mrb[0].mxu0 %v451
        %v521 = vpop.f32.mrb[0].mxu0
        %v522 = vadd.f32 0.0, %v521
        %v523 = vpop.f32.mrb[0].mxu0
        %524 = vdwg.mxu0
        %vm525 = vcmask 64512
        %v526 = vsel %vm525, %v522, -inf
        %527 = vmax.xlane.f32.xlu0 %v526
        %v528 = vpop.xlane.xlu0 %527
        %v529 = vsub.f32 %v522, %v528
        %v530 = vmul.f32 %v529, 1.442695
        %v531 = vpow.pop %v530
        %v532 = vsel %vm525, %v531, 0.0
        %533 = vadd.xlane.f32.xlu0 %v532
        %v534 = vpop.xlane.xlu0 %533
        %v535 = vrcp.pop %v534
        %v536 = vmul.f32 %v531, %v535
        %537 = vrot.lane.b32.xlu0 %v445, 96
        %v538 = vpop.permute.xlu0 %537
        %v541 = vsel %vm525, %v536, 0
        %543 = vmatprep.subr.mxu0 0.0
        %544 = vmatpush1.msra.mxu0 %v538
        %545 = vmatprep.subr.mxu0 0.0
        %546 = vmatpush1.msra.mxu0 0.0
        %547 = vmatprep.subr.mxu0 0.0
        %548 = vmatpush1.msra.mxu0 0.0
        %549 = vmatprep.subr.mxu0 0.0
        %550 = vmatpush1.msra.mxu0 0.0
        %551 = vmatprep.subr.mxu0 0.0
        %552 = vmatpush1.msra.mxu0 0.0
        %553 = vmatprep.subr.mxu0 0.0
        %554 = vmatpush1.msra.mxu0 0.0
        %555 = vmatprep.subr.mxu0 0.0
        %556 = vmatpush1.msra.mxu0 0.0
        %557 = vmatprep.subr.mxu0 0.0
        %558 = vmatpush1.msra.mxu0 0.0
        %559 = vmatprep.subr.mxu0 0.0
        %560 = vmatpush1.msra.mxu0 0.0
        %561 = vmatprep.subr.mxu0 0.0
        %562 = vmatpush1.msra.mxu0 0.0
        %563 = vmatprep.subr.mxu0 0.0
        %564 = vmatpush1.msra.mxu0 0.0
        %565 = vmatprep.subr.mxu0 0.0
        %566 = vmatpush1.msra.mxu0 0.0
        %567 = vmatprep.subr.mxu0 0.0
        %568 = vmatpush1.msra.mxu0 0.0
        %569 = vmatprep.subr.mxu0 0.0
        %570 = vmatpush1.msra.mxu0 0.0
        %571 = vmatprep.subr.mxu0 0.0
        %572 = vmatpush1.msra.mxu0 0.0
        %573 = vmatprep.subr.mxu0 0.0
        %574 = vmatpush1.msra.mxu0 0.0
        %575 = vmatprep.subr.mxu0 0.0
        %576 = vmatpush1.msra.mxu0 0.0
        %577 = vmatprep.subr.mxu0 0.0
        %578 = vmatpush1.msra.mxu0 0.0
        %579 = vmatprep.subr.mxu0 0.0
        %580 = vmatpush1.msra.mxu0 0.0
        %581 = vmatprep.subr.mxu0 0.0
        %582 = vmatpush1.msra.mxu0 0.0
        %583 = vmatprep.subr.mxu0 0.0
        %584 = vmatpush1.msra.mxu0 0.0
        %585 = vmatprep.subr.mxu0 0.0
        %586 = vmatpush1.msra.mxu0 0.0
        %587 = vmatprep.subr.mxu0 0.0
        %588 = vmatpush1.msra.mxu0 0.0
        %589 = vmatprep.subr.mxu0 0.0
        %590 = vmatpush1.msra.mxu0 0.0
        %591 = vmatprep.subr.mxu0 0.0
        %592 = vmatpush1.msra.mxu0 0.0
        %593 = vmatprep.subr.mxu0 0.0
        %594 = vmatpush1.msra.mxu0 0.0
        %595 = vmatprep.subr.mxu0 0.0
        %596 = vmatpush1.msra.mxu0 0.0
        %597 = vmatprep.subr.mxu0 0.0
        %598 = vmatpush1.msra.mxu0 0.0
        %599 = vmatprep.subr.mxu0 0.0
        %600 = vmatpush1.msra.mxu0 0.0
        %601 = vmatprep.subr.mxu0 0.0
        %602 = vmatpush1.msra.mxu0 0.0
        %603 = vmatprep.subr.mxu0 0.0
        %604 = vmatpush1.msra.mxu0 0.0
        %605 = vmatprep.subr.mxu0 0.0
        %606 = vmatpush1.msra.mxu0 0.0
        %607 = vmatprep.mubr.f32.mxu0 0.0
        %608 = vmatmul.mubr.f32.gmra.mrb[0].mxu0 %v541
        %v609 = vpop.f32.mrb[0].mxu0
        %v610 = vadd.f32 0.0, %v609
        %v611 = vpop.f32.mrb[0].mxu0
        %612 = vdwg.mxu0
        %v614 = vsel %vm374, %v610, 0
        %616 = vmatprep.subr.mxu0 0.0
        %617 = vmatpush1.msra.mxu0 %v324
        %618 = vmatprep.subr.mxu0 0.0
        %619 = vmatpush1.msra.mxu0 %v325
        %620 = vmatprep.subr.mxu0 0.0
        %621 = vmatpush1.msra.mxu0 0.0
        %622 = vmatprep.subr.mxu0 0.0
        %623 = vmatpush1.msra.mxu0 0.0
        %624 = vmatprep.subr.mxu0 0.0
        %625 = vmatpush1.msra.mxu0 0.0
        %626 = vmatprep.subr.mxu0 0.0
        %627 = vmatpush1.msra.mxu0 0.0
        %628 = vmatprep.subr.mxu0 0.0
        %629 = vmatpush1.msra.mxu0 0.0
        %630 = vmatprep.subr.mxu0 0.0
        %631 = vmatpush1.msra.mxu0 0.0
        %632 = vmatprep.subr.mxu0 0.0
        %633 = vmatpush1.msra.mxu0 0.0
        %634 = vmatprep.subr.mxu0 0.0
        %635 = vmatpush1.msra.mxu0 0.0
        %636 = vmatprep.subr.mxu0 0.0
        %637 = vmatpush1.msra.mxu0 0.0
        %638 = vmatprep.subr.mxu0 0.0
        %639 = vmatpush1.msra.mxu0 0.0
        %640 = vmatprep.subr.mxu0 0.0
        %641 = vmatpush1.msra.mxu0 0.0
        %642 = vmatprep.subr.mxu0 0.0
        %643 = vmatpush1.msra.mxu0 0.0
        %644 = vmatprep.subr.mxu0 0.0
        %645 = vmatpush1.msra.mxu0 0.0
        %646 = vmatprep.subr.mxu0 0.0
        %647 = vmatpush1.msra.mxu0 0.0
        %648 = vmatprep.subr.mxu0 0.0
        %649 = vmatpush1.msra.mxu0 0.0
        %650 = vmatprep.subr.mxu0 0.0
        %651 = vmatpush1.msra.mxu0 0.0
        %652 = vmatprep.subr.mxu0 0.0
        %653 = vmatpush1.msra.mxu0 0.0
        %654 = vmatprep.subr.mxu0 0.0
        %655 = vmatpush1.msra.mxu0 0.0
        %656 = vmatprep.subr.mxu0 0.0
        %657 = vmatpush1.msra.mxu0 0.0
        %658 = vmatprep.subr.mxu0 0.0
        %659 = vmatpush1.msra.mxu0 0.0
        %660 = vmatprep.subr.mxu0 0.0
        %661 = vmatpush1.msra.mxu0 0.0
        %662 = vmatprep.subr.mxu0 0.0
        %663 = vmatpush1.msra.mxu0 0.0
        %664 = vmatprep.subr.mxu0 0.0
        %665 = vmatpush1.msra.mxu0 0.0
        %666 = vmatprep.subr.mxu0 0.0
        %667 = vmatpush1.msra.mxu0 0.0
        %668 = vmatprep.subr.mxu0 0.0
        %669 = vmatpush1.msra.mxu0 0.0
        %670 = vmatprep.subr.mxu0 0.0
        %671 = vmatpush1.msra.mxu0 0.0
        %672 = vmatprep.subr.mxu0 0.0
        %673 = vmatpush1.msra.mxu0 0.0
        %674 = vmatprep.subr.mxu0 0.0
        %675 = vmatpush1.msra.mxu0 0.0
        %676 = vmatprep.subr.mxu0 0.0
        %677 = vmatpush1.msra.mxu0 0.0
        %678 = vmatprep.subr.mxu0 0.0
        %679 = vmatpush1.msra.mxu0 0.0
        %680 = vmatprep.mubr.f32.mxu0 0.0
        %681 = vmatmul.mubr.f32.gmra.mrb[0].mxu0 %v614
        %v682 = vpop.f32.mrb[0].mxu0
        %v683 = vadd.f32 %v343, %v682
        %v684 = vpop.f32.mrb[0].mxu0
        %685 = vdwg.mxu0
        %v686 = vadd.f32 %v321, %v683
        %v687 = vsel %vm374, %v686, 0.0
        %688 = vadd.xlane.f32.xlu0 %v687
        %v689 = vpop.xlane.xlu0 %688
        %v690 = vrcp.pop 16.0
        %v691 = vmul.f32 %v689, %v690
        %v692 = vsub.f32 %v686, %v691
        %v693 = vmul.f32 %v692, %v692
        %v694 = vsel %vm374, %v693, 0.0
        %695 = vadd.xlane.f32.xlu0 %v694
        %v696 = vpop.xlane.xlu0 %695
        %v697 = vmul.f32 %v696, %v690
        %v698 = vadd.f32 %v697, 1e-05
        %v699 = vrsqrt.pop %v698
        %v700 = vmul.f32 %v692, %v699
        %v701 = vmul.f32 %v700, %v358
        %v702 = vadd.f32 %v701, %v363
        %v704 = vsel %vm374, %v702, 0
        %706 = vmatprep.subr.mxu0 0.0
        %707 = vmatpush1.msra.mxu0 %v326
        %708 = vmatprep.subr.mxu0 0.0
        %709 = vmatpush1.msra.mxu0 %v327
        %710 = vmatprep.subr.mxu0 0.0
        %711 = vmatpush1.msra.mxu0 0.0
        %712 = vmatprep.subr.mxu0 0.0
        %713 = vmatpush1.msra.mxu0 0.0
        %714 = vmatprep.subr.mxu0 0.0
        %715 = vmatpush1.msra.mxu0 0.0
        %716 = vmatprep.subr.mxu0 0.0
        %717 = vmatpush1.msra.mxu0 0.0
        %718 = vmatprep.subr.mxu0 0.0
        %719 = vmatpush1.msra.mxu0 0.0
        %720 = vmatprep.subr.mxu0 0.0
        %721 = vmatpush1.msra.mxu0 0.0
        %722 = vmatprep.subr.mxu0 0.0
        %723 = vmatpush1.msra.mxu0 0.0
        %724 = vmatprep.subr.mxu0 0.0
        %725 = vmatpush1.msra.mxu0 0.0
        %726 = vmatprep.subr.mxu0 0.0
        %727 = vmatpush1.msra.mxu0 0.0
        %728 = vmatprep.subr.mxu0 0.0
        %729 = vmatpush1.msra.mxu0 0.0
        %730 = vmatprep.subr.mxu0 0.0
        %731 = vmatpush1.msra.mxu0 0.0
        %732 = vmatprep.subr.mxu0 0.0
        %733 = vmatpush1.msra.mxu0 0.0
        %734 = vmatprep.subr.mxu0 0.0
        %735 = vmatpush1.msra.mxu0 0.0
        %736 = vmatprep.subr.mxu0 0.0
        %737 = vmatpush1.msra.mxu0 0.0
        %738 = vmatprep.subr.mxu0 0.0
        %739 = vmatpush1.msra.mxu0 0.0
        %740 = vmatprep.subr.mxu0 0.0
        %741 = vmatpush1.msra.mxu0 0.0
        %742 = vmatprep.subr.mxu0 0.0
        %743 = vmatpush1.msra.mxu0 0.0
        %744 = vmatprep.subr.mxu0 0.0
        %745 = vmatpush1.msra.mxu0 0.0
        %746 = vmatprep.subr.mxu0 0.0
        %747 = vmatpush1.msra.mxu0 0.0
        %748 = vmatprep.subr.mxu0 0.0
        %749 = vmatpush1.msra.mxu0 0.0
        %750 = vmatprep.subr.mxu0 0.0
        %751 = vmatpush1.msra.mxu0 0.0
        %752 = vmatprep.subr.mxu0 0.0
        %753 = vmatpush1.msra.mxu0 0.0
        %754 = vmatprep.subr.mxu0 0.0
        %755 = vmatpush1.msra.mxu0 0.0
        %756 = vmatprep.subr.mxu0 0.0
        %757 = vmatpush1.msra.mxu0 0.0
        %758 = vmatprep.subr.mxu0 0.0
        %759 = vmatpush1.msra.mxu0 0.0
        %760 = vmatprep.subr.mxu0 0.0
        %761 = vmatpush1.msra.mxu0 0.0
        %762 = vmatprep.subr.mxu0 0.0
        %763 = vmatpush1.msra.mxu0 0.0
        %764 = vmatprep.subr.mxu0 0.0
        %765 = vmatpush1.msra.mxu0 0.0
        %766 = vmatprep.subr.mxu0 0.0
        %767 = vmatpush1.msra.mxu0 0.0
        %768 = vmatprep.subr.mxu0 0.0
        %769 = vmatpush1.msra.mxu0 0.0
        %770 = vmatprep.mubr.f32.mxu0 0.0
        %771 = vmatmul.mubr.f32.gmra.mrb[0].mxu0 %v704
        %v772 = vpop.f32.mrb[0].mxu0
        %v773 = vadd.f32 %v348, %v772
        %v774 = vpop.f32.mrb[0].mxu0
        %775 = vdwg.mxu0
        %v776 = vmax.f32 %v773, 0.0
        %vm777 = vcmask 261120
        %v779 = vsel %vm777, %v776, 0
        %781 = vmatprep.subr.mxu0 0.0
        %782 = vmatpush1.msra.mxu0 %v328
        %783 = vmatprep.subr.mxu0 0.0
        %784 = vmatpush1.msra.mxu0 %v329
        %785 = vmatprep.subr.mxu0 0.0
        %786 = vmatpush1.msra.mxu0 %v330
        %787 = vmatprep.subr.mxu0 0.0
        %788 = vmatpush1.msra.mxu0 %v331
        %789 = vmatprep.subr.mxu0 0.0
        %790 = vmatpush1.msra.mxu0 0.0
        %791 = vmatprep.subr.mxu0 0.0
        %792 = vmatpush1.msra.mxu0 0.0
        %793 = vmatprep.subr.mxu0 0.0
        %794 = vmatpush1.msra.mxu0 0.0
        %795 = vmatprep.subr.mxu0 0.0
        %796 = vmatpush1.msra.mxu0 0.0
        %797 = vmatprep.subr.mxu0 0.0
        %798 = vmatpush1.msra.mxu0 0.0
        %799 = vmatprep.subr.mxu0 0.0
        %800 = vmatpush1.msra.mxu0 0.0
        %801 = vmatprep.subr.mxu0 0.0
        %802 = vmatpush1.msra.mxu0 0.0
        %803 = vmatprep.subr.mxu0 0.0
        %804 = vmatpush1.msra.mxu0 0.0
        %805 = vmatprep.subr.mxu0 0.0
        %806 = vmatpush1.msra.mxu0 0.0
        %807 = vmatprep.subr.mxu0 0.0
        %808 = vmatpush1.msra.mxu0 0.0
        %809 = vmatprep.subr.mxu0 0.0
        %810 = vmatpush1.msra.mxu0 0.0
        %811 = vmatprep.subr.mxu0 0.0
        %812 = vmatpush1.msra.mxu0 0.0
        %813 = vmatprep.subr.mxu0 0.0
        %814 = vmatpush1.msra.mxu0 0.0
        %815 = vmatprep.subr.mxu0 0.0
        %816 = vmatpush1.msra.mxu0 0.0
        %817 = vmatprep.subr.mxu0 0.0
        %818 = vmatpush1.msra.mxu0 0.0
        %819 = vmatprep.subr.mxu0 0.0
        %820 = vmatpush1.msra.mxu0 0.0
        %821 = vmatprep.subr.mxu0 0.0
        %822 = vmatpush1.msra.mxu0 0.0
        %823 = vmatprep.subr.mxu0 0.0
        %824 = vmatpush1.msra.mxu0 0.0
        %825 = vmatprep.subr.mxu0 0.0
        %826 = vmatpush1.msra.mxu0 0.0
        %827 = vmatprep.subr.mxu0 0.0
        %828 = vmatpush1.msra.mxu0 0.0
        %829 = vmatprep.subr.mxu0 0.0
        %830 = vmatpush1.msra.mxu0 0.0
        %831 = vmatprep.subr.mxu0 0.0
        %832 = vmatpush1.msra.mxu0 0.0
        %833 = vmatprep.subr.mxu0 0.0
        %834 = vmatpush1.msra.mxu0 0.0
        %835 = vmatprep.subr.mxu0 0.0
        %836 = vmatpush1.msra.mxu0 0.0
        %837 = vmatprep.subr.mxu0 0.0
        %838 = vmatpush1.msra.mxu0 0.0
        %839 = vmatprep.subr.mxu0 0.0
        %840 = vmatpush1.msra.mxu0 0.0
        %841 = vmatprep.subr.mxu0 0.0
        %842 = vmatpush1.msra.mxu0 0.0
        %843 = vmatprep.subr.mxu0 0.0
        %844 = vmatpush1.msra.mxu0 0.0
        %845 = vmatprep.mubr.f32.mxu0 0.0
        %846 = vmatmul.mubr.f32.gmra.mrb[0].mxu0 %v779
        %v847 = vpop.f32.mrb[0].mxu0
        %v848 = vadd.f32 %v353, %v847
        %v849 = vpop.f32.mrb[0].mxu0
        %850 = vdwg.mxu0
        %v851 = vadd.f32 %v702, %v848
        %v852 = vsel %vm374, %v851, 0.0
        %853 = vadd.xlane.f32.xlu0 %v852
        %v854 = vpop.xlane.xlu0 %853
        %v855 = vmul.f32 %v854, %v690
        %v856 = vsub.f32 %v851, %v855
        %v857 = vmul.f32 %v856, %v856
        %v858 = vsel %vm374, %v857, 0.0
        %859 = vadd.xlane.f32.xlu0 %v858
        %v860 = vpop.xlane.xlu0 %859
        %v861 = vmul.f32 %v860, %v690
        %v862 = vadd.f32 %v861, 1e-05
        %v863 = vrsqrt.pop %v862
        %v864 = vmul.f32 %v856, %v863
        %v865 = vmul.f32 %v864, %v368
        %v866 = vadd.f32 %v865, %v373
        %v868 = vsel %vm374, %v866, 0
        %870 = vmatprep.subr.mxu0 0.0
        %871 = vmatpush1.msra.mxu0 %v322
        %872 = vmatprep.subr.mxu0 0.0
        %873 = vmatpush1.msra.mxu0 %v323
        %874 = vmatprep.subr.mxu0 0.0
        %875 = vmatpush1.msra.mxu0 0.0
        %876 = vmatprep.subr.mxu0 0.0
        %877 = vmatpush1.msra.mxu0 0.0
        %878 = vmatprep.subr.mxu0 0.0
        %879 = vmatpush1.msra.mxu0 0.0
        %880 = vmatprep.subr.mxu0 0.0
        %881 = vmatpush1.msra.mxu0 0.0
        %882 = vmatprep.subr.mxu0 0.0
        %883 = vmatpush1.msra.mxu0 0.0
        %884 = vmatprep.subr.mxu0 0.0
        %885 = vmatpush1.msra.mxu0 0.0
        %886 = vmatprep.subr.mxu0 0.0
        %887 = vmatpush1.msra.mxu0 0.0
        %888 = vmatprep.subr.mxu0 0.0
        %889 = vmatpush1.msra.mxu0 0.0
        %890 = vmatprep.subr.mxu0 0.0
        %891 = vmatpush1.msra.mxu0 0.0
        %892 = vmatprep.subr.mxu0 0.0
        %893 = vmatpush1.msra.mxu0 0.0
        %894 = vmatprep.subr.mxu0 0.0
        %895 = vmatpush1.msra.mxu0 0.0
        %896 = vmatprep.subr.mxu0 0.0
        %897 = vmatpush1.msra.mxu0 0.0
        %898 = vmatprep.subr.mxu0 0.0
        %899 = vmatpush1.msra.mxu0 0.0
        %900 = vmatprep.subr.mxu0 0.0
        %901 = vmatpush1.msra.mxu0 0.0
        %902 = vmatprep.subr.mxu0 0.0
        %903 = vmatpush1.msra.mxu0 0.0
        %904 = vmatprep.subr.mxu0 0.0
        %905 = vmatpush1.msra.mxu0 0.0
        %906 = vmatprep.subr.mxu0 0.0
        %907 = vmatpush1.msra.mxu0 0.0
        %908 = vmatprep.subr.mxu0 0.0
        %909 = vmatpush1.msra.mxu0 0.0
        %910 = vmatprep.subr.mxu0 0.0
        %911 = vmatpush1.msra.mxu0 0.0
        %912 = vmatprep.subr.mxu0 0.0
        %913 = vmatpush1.msra.mxu0 0.0
        %914 = vmatprep.subr.mxu0 0.0
        %915 = vmatpush1.msra.mxu0 0.0
        %916 = vmatprep.subr.mxu0 0.0
        %917 = vmatpush1.msra.mxu0 0.0
        %918 = vmatprep.subr.mxu0 0.0
        %919 = vmatpush1.msra.mxu0 0.0
        %920 = vmatprep.subr.mxu0 0.0
        %921 = vmatpush1.msra.mxu0 0.0
        %922 = vmatprep.subr.mxu0 0.0
        %923 = vmatpush1.msra.mxu0 0.0
        %924 = vmatprep.subr.mxu0 0.0
        %925 = vmatpush1.msra.mxu0 0.0
        %926 = vmatprep.subr.mxu0 0.0
        %927 = vmatpush1.msra.mxu0 0.0
        %928 = vmatprep.subr.mxu0 0.0
        %929 = vmatpush1.msra.mxu0 0.0
        %930 = vmatprep.subr.mxu0 0.0
        %931 = vmatpush1.msra.mxu0 0.0
        %932 = vmatprep.subr.mxu0 0.0
        %933 = vmatpush1.msra.mxu0 0.0
        %934 = vmatprep.mubr.f32.mxu0 0.0
        %935 = vmatmul.mubr.f32.gmra.mrb[0].mxu0 %v868
        %v936 = vpop.f32.mrb[0].mxu0
        %v937 = vadd.f32 %v337, %v936
        %v938 = vpop.f32.mrb[0].mxu0
        %939 = vdwg.mxu0
        %941 = vrot.lane.b32.xlu0 %v937, 112
        %v942 = vpop.permute.xlu0 %941
        %v943 = vsel %vm374, %v937, 0
        %v945 = vsel %vm374, %v942, 0
        %947 = vmatprep.subr.mxu0 0.0
        %948 = vmatpush1.xpose.msra.mxu0 %v945
        %949 = vmatprep.subr.mxu0 0.0
        %950 = vmatpush1.xpose.msra.mxu0 0.0
        %951 = vmatprep.subr.mxu0 0.0
        %952 = vmatpush1.xpose.msra.mxu0 0.0
        %953 = vmatprep.subr.mxu0 0.0
        %954 = vmatpush1.xpose.msra.mxu0 0.0
        %955 = vmatprep.subr.mxu0 0.0
        %956 = vmatpush1.xpose.msra.mxu0 0.0
        %957 = vmatprep.subr.mxu0 0.0
        %958 = vmatpush1.xpose.msra.mxu0 0.0
        %959 = vmatprep.subr.mxu0 0.0
        %960 = vmatpush1.xpose.msra.mxu0 0.0
        %961 = vmatprep.subr.mxu0 0.0
        %962 = vmatpush1.xpose.msra.mxu0 0.0
        %963 = vmatprep.subr.mxu0 0.0
        %964 = vmatpush1.xpose.msra.mxu0 0.0
        %965 = vmatprep.subr.mxu0 0.0
        %966 = vmatpush1.xpose.msra.mxu0 0.0
        %967 = vmatprep.subr.mxu0 0.0
        %968 = vmatpush1.xpose.msra.mxu0 0.0
        %969 = vmatprep.subr.mxu0 0.0
        %970 = vmatpush1.xpose.msra.mxu0 0.0
        %971 = vmatprep.subr.mxu0 0.0
        %972 = vmatpush1.xpose.msra.mxu0 0.0
        %973 = vmatprep.subr.mxu0 0.0
        %974 = vmatpush1.xpose.msra.mxu0 0.0
        %975 = vmatprep.subr.mxu0 0.0
        %976 = vmatpush1.xpose.msra.mxu0 0.0
        %977 = vmatprep.subr.mxu0 0.0
        %978 = vmatpush1.xpose.msra.mxu0 0.0
        %979 = vmatprep.subr.mxu0 0.0
        %980 = vmatpush1.xpose.msra.mxu0 0.0
        %981 = vmatprep.subr.mxu0 0.0
        %982 = vmatpush1.xpose.msra.mxu0 0.0
        %983 = vmatprep.subr.mxu0 0.0
        %984 = vmatpush1.xpose.msra.mxu0 0.0
        %985 = vmatprep.subr.mxu0 0.0
        %986 = vmatpush1.xpose.msra.mxu0 0.0
        %987 = vmatprep.subr.mxu0 0.0
        %988 = vmatpush1.xpose.msra.mxu0 0.0
        %989 = vmatprep.subr.mxu0 0.0
        %990 = vmatpush1.xpose.msra.mxu0 0.0
        %991 = vmatprep.subr.mxu0 0.0
        %992 = vmatpush1.xpose.msra.mxu0 0.0
        %993 = vmatprep.subr.mxu0 0.0
        %994 = vmatpush1.xpose.msra.mxu0 0.0
        %995 = vmatprep.subr.mxu0 0.0
        %996 = vmatpush1.xpose.msra.mxu0 0.0
        %997 = vmatprep.subr.mxu0 0.0
        %998 = vmatpush1.xpose.msra.mxu0 0.0
        %999 = vmatprep.subr.mxu0 0.0
        %1000 = vmatpush1.xpose.msra.mxu0 0.0
        %1001 = vmatprep.subr.mxu0 0.0
        %1002 = vmatpush1.xpose.msra.mxu0 0.0
        %1003 = vmatprep.subr.mxu0 0.0
        %1004 = vmatpush1.xpose.msra.mxu0 0.0
        %1005 = vmatprep.subr.mxu0 0.0
        %1006 = vmatpush1.xpose.msra.mxu0 0.0
        %1007 = vmatprep.subr.mxu0 0.0
        %1008 = vmatpush1.xpose.msra.mxu0 0.0
        %1009 = vmatprep.subr.mxu0 0.0
        %1010 = vmatpush1.xpose.msra.mxu0 0.0
        %1011 = vmatprep.mubr.f32.mxu0 0.0
        %1012 = vmatmul.mubr.f32.gmra.mrb[0].mxu0 %v943
        %v1013 = vpop.f32.mrb[0].mxu0
        %v1014 = vadd.f32 0.0, %v1013
        %v1015 = vpop.f32.mrb[0].mxu0
        %1016 = vdwg.mxu0
        %v1017 = vsel %vm525, %v1014, -inf
        %1018 = vmax.xlane.f32.xlu0 %v1017
        %v1019 = vpop.xlane.xlu0 %1018
        %v1020 = vsub.f32 %v1014, %v1019
        %v1021 = vmul.f32 %v1020, 1.442695
        %v1022 = vpow.pop %v1021
        %v1023 = vsel %vm525, %v1022, 0.0
        %1024 = vadd.xlane.f32.xlu0 %v1023
        %v1025 = vpop.xlane.xlu0 %1024
        %v1026 = vrcp.pop %v1025
        %v1027 = vmul.f32 %v1022, %v1026
        %1028 = vrot.lane.b32.xlu0 %v937, 96
        %v1029 = vpop.permute.xlu0 %1028
        %v1032 = vsel %vm525, %v1027, 0
        %1034 = vmatprep.subr.mxu0 0.0
        %1035 = vmatpush1.msra.mxu0 %v1029
        %1036 = vmatprep.subr.mxu0 0.0
        %1037 = vmatpush1.msra.mxu0 0.0
        %1038 = vmatprep.subr.mxu0 0.0
        %1039 = vmatpush1.msra.mxu0 0.0
        %1040 = vmatprep.subr.mxu0 0.0
        %1041 = vmatpush1.msra.mxu0 0.0
        %1042 = vmatprep.subr.mxu0 0.0
        %1043 = vmatpush1.msra.mxu0 0.0
        %1044 = vmatprep.subr.mxu0 0.0
        %1045 = vmatpush1.msra.mxu0 0.0
        %1046 = vmatprep.subr.mxu0 0.0
        %1047 = vmatpush1.msra.mxu0 0.0
        %1048 = vmatprep.subr.mxu0 0.0
        %1049 = vmatpush1.msra.mxu0 0.0
        %1050 = vmatprep.subr.mxu0 0.0
        %1051 = vmatpush1.msra.mxu0 0.0
        %1052 = vmatprep.subr.mxu0 0.0
        %1053 = vmatpush1.msra.mxu0 0.0
        %1054 = vmatprep.subr.mxu0 0.0
        %1055 = vmatpush1.msra.mxu0 0.0
        %1056 = vmatprep.subr.mxu0 0.0
        %1057 = vmatpush1.msra.mxu0 0.0
        %1058 = vmatprep.subr.mxu0 0.0
        %1059 = vmatpush1.msra.mxu0 0.0
        %1060 = vmatprep.subr.mxu0 0.0
        %1061 = vmatpush1.msra.mxu0 0.0
        %1062 = vmatprep.subr.mxu0 0.0
        %1063 = vmatpush1.msra.mxu0 0.0
        %1064 = vmatprep.subr.mxu0 0.0
        %1065 = vmatpush1.msra.mxu0 0.0
        %1066 = vmatprep.subr.mxu0 0.0
        %1067 = vmatpush1.msra.mxu0 0.0
        %1068 = vmatprep.subr.mxu0 0.0
        %1069 = vmatpush1.msra.mxu0 0.0
        %1070 = vmatprep.subr.mxu0 0.0
        %1071 = vmatpush1.msra.mxu0 0.0
        %1072 = vmatprep.subr.mxu0 0.0
        %1073 = vmatpush1.msra.mxu0 0.0
        %1074 = vmatprep.subr.mxu0 0.0
        %1075 = vmatpush1.msra.mxu0 0.0
        %1076 = vmatprep.subr.mxu0 0.0
        %1077 = vmatpush1.msra.mxu0 0.0
        %1078 = vmatprep.subr.mxu0 0.0
        %1079 = vmatpush1.msra.mxu0 0.0
        %1080 = vmatprep.subr.mxu0 0.0
        %1081 = vmatpush1.msra.mxu0 0.0
        %1082 = vmatprep.subr.mxu0 0.0
        %1083 = vmatpush1.msra.mxu0 0.0
        %1084 = vmatprep.subr.mxu0 0.0
        %1085 = vmatpush1.msra.mxu0 0.0
        %1086 = vmatprep.subr.mxu0 0.0
        %1087 = vmatpush1.msra.mxu0 0.0
        %1088 = vmatprep.subr.mxu0 0.0
        %1089 = vmatpush1.msra.mxu0 0.0
        %1090 = vmatprep.subr.mxu0 0.0
        %1091 = vmatpush1.msra.mxu0 0.0
        %1092 = vmatprep.subr.mxu0 0.0
        %1093 = vmatpush1.msra.mxu0 0.0
        %1094 = vmatprep.subr.mxu0 0.0
        %1095 = vmatpush1.msra.mxu0 0.0
        %1096 = vmatprep.subr.mxu0 0.0
        %1097 = vmatpush1.msra.mxu0 0.0
        %1098 = vmatprep.mubr.f32.mxu0 0.0
        %1099 = vmatmul.mubr.f32.gmra.mrb[0].mxu0 %v1032
        %v1100 = vpop.f32.mrb[0].mxu0
        %v1101 = vadd.f32 0.0, %v1100
        %v1102 = vpop.f32.mrb[0].mxu0
        %1103 = vdwg.mxu0
        %v1105 = vsel %vm374, %v1101, 0
        %1107 = vmatprep.subr.mxu0 0.0
        %1108 = vmatpush1.msra.mxu0 %v324
        %1109 = vmatprep.subr.mxu0 0.0
        %1110 = vmatpush1.msra.mxu0 %v325
        %1111 = vmatprep.subr.mxu0 0.0
        %1112 = vmatpush1.msra.mxu0 0.0
        %1113 = vmatprep.subr.mxu0 0.0
        %1114 = vmatpush1.msra.mxu0 0.0
        %1115 = vmatprep.subr.mxu0 0.0
        %1116 = vmatpush1.msra.mxu0 0.0
        %1117 = vmatprep.subr.mxu0 0.0
        %1118 = vmatpush1.msra.mxu0 0.0
        %1119 = vmatprep.subr.mxu0 0.0
        %1120 = vmatpush1.msra.mxu0 0.0
        %1121 = vmatprep.subr.mxu0 0.0
        %1122 = vmatpush1.msra.mxu0 0.0
        %1123 = vmatprep.subr.mxu0 0.0
        %1124 = vmatpush1.msra.mxu0 0.0
        %1125 = vmatprep.subr.mxu0 0.0
        %1126 = vmatpush1.msra.mxu0 0.0
        %1127 = vmatprep.subr.mxu0 0.0
        %1128 = vmatpush1.msra.mxu0 0.0
        %1129 = vmatprep.subr.mxu0 0.0
        %1130 = vmatpush1.msra.mxu0 0.0
        %1131 = vmatprep.subr.mxu0 0.0
        %1132 = vmatpush1.msra.mxu0 0.0
        %1133 = vmatprep.subr.mxu0 0.0
        %1134 = vmatpush1.msra.mxu0 0.0
        %1135 = vmatprep.subr.mxu0 0.0
        %1136 = vmatpush1.msra.mxu0 0.0
        %1137 = vmatprep.subr.mxu0 0.0
        %1138 = vmatpush1.msra.mxu0 0.0
        %1139 = vmatprep.subr.mxu0 0.0
        %1140 = vmatpush1.msra.mxu0 0.0
        %1141 = vmatprep.subr.mxu0 0.0
        %1142 = vmatpush1.msra.mxu0 0.0
        %1143 = vmatprep.subr.mxu0 0.0
        %1144 = vmatpush1.msra.mxu0 0.0
        %1145 = vmatprep.subr.mxu0 0.0
        %1146 = vmatpush1.msra.mxu0 0.0
        %1147 = vmatprep.subr.mxu0 0.0
        %1148 = vmatpush1.msra.mxu0 0.0
        %1149 = vmatprep.subr.mxu0 0.0
        %1150 = vmatpush1.msra.mxu0 0.0
        %1151 = vmatprep.subr.mxu0 0.0
        %1152 = vmatpush1.msra.mxu0 0.0
        %1153 = vmatprep.subr.mxu0 0.0
        %1154 = vmatpush1.msra.mxu0 0.0
        %1155 = vmatprep.subr.mxu0 0.0
        %1156 = vmatpush1.msra.mxu0 0.0
        %1157 = vmatprep.subr.mxu0 0.0
        %1158 = vmatpush1.msra.mxu0 0.0
        %1159 = vmatprep.subr.mxu0 0.0
        %1160 = vmatpush1.msra.mxu0 0.0
        %1161 = vmatprep.subr.mxu0 0.0
        %1162 = vmatpush1.msra.mxu0 0.0
        %1163 = vmatprep.subr.mxu0 0.0
        %1164 = vmatpush1.msra.mxu0 0.0
        %1165 = vmatprep.subr.mxu0 0.0
        %1166 = vmatpush1.msra.mxu0 0.0
        %1167 = vmatprep.subr.mxu0 0.0
        %1168 = vmatpush1.msra.mxu0 0.0
        %1169 = vmatprep.subr.mxu0 0.0
        %1170 = vmatpush1.msra.mxu0 0.0
        %1171 = vmatprep.mubr.f32.mxu0 0.0
        %1172 = vmatmul.mubr.f32.gmra.mrb[0].mxu0 %v1105
        %v1173 = vpop.f32.mrb[0].mxu0
        %v1174 = vadd.f32 %v343, %v1173
        %v1175 = vpop.f32.mrb[0].mxu0
        %1176 = vdwg.mxu0
        %v1177 = vadd.f32 %v866, %v1174
        %v1178 = vsel %vm374, %v1177, 0.0
        %1179 = vadd.xlane.f32.xlu0 %v1178
        %v1180 = vpop.xlane.xlu0 %1179
        %v1181 = vmul.f32 %v1180, %v690
        %v1182 = vsub.f32 %v1177, %v1181
        %v1183 = vmul.f32 %v1182, %v1182
        %v1184 = vsel %vm374, %v1183, 0.0
        %1185 = vadd.xlane.f32.xlu0 %v1184
        %v1186 = vpop.xlane.xlu0 %1185
        %v1187 = vmul.f32 %v1186, %v690
        %v1188 = vadd.f32 %v1187, 1e-05
        %v1189 = vrsqrt.pop %v1188
        %v1190 = vmul.f32 %v1182, %v1189
        %v1191 = vmul.f32 %v1190, %v358
        %v1192 = vadd.f32 %v1191, %v363
        %v1194 = vsel %vm374, %v1192, 0
        %1196 = vmatprep.subr.mxu0 0.0
        %1197 = vmatpush1.msra.mxu0 %v326
        %1198 = vmatprep.subr.mxu0 0.0
        %1199 = vmatpush1.msra.mxu0 %v327
        %1200 = vmatprep.subr.mxu0 0.0
        %1201 = vmatpush1.msra.mxu0 0.0
        %1202 = vmatprep.subr.mxu0 0.0
        %1203 = vmatpush1.msra.mxu0 0.0
        %1204 = vmatprep.subr.mxu0 0.0
        %1205 = vmatpush1.msra.mxu0 0.0
        %1206 = vmatprep.subr.mxu0 0.0
        %1207 = vmatpush1.msra.mxu0 0.0
        %1208 = vmatprep.subr.mxu0 0.0
        %1209 = vmatpush1.msra.mxu0 0.0
        %1210 = vmatprep.subr.mxu0 0.0
        %1211 = vmatpush1.msra.mxu0 0.0
        %1212 = vmatprep.subr.mxu0 0.0
        %1213 = vmatpush1.msra.mxu0 0.0
        %1214 = vmatprep.subr.mxu0 0.0
        %1215 = vmatpush1.msra.mxu0 0.0
        %1216 = vmatprep.subr.mxu0 0.0
        %1217 = vmatpush1.msra.mxu0 0.0
        %1218 = vmatprep.subr.mxu0 0.0
        %1219 = vmatpush1.msra.mxu0 0.0
        %1220 = vmatprep.subr.mxu0 0.0
        %1221 = vmatpush1.msra.mxu0 0.0
        %1222 = vmatprep.subr.mxu0 0.0
        %1223 = vmatpush1.msra.mxu0 0.0
        %1224 = vmatprep.subr.mxu0 0.0
        %1225 = vmatpush1.msra.mxu0 0.0
        %1226 = vmatprep.subr.mxu0 0.0
        %1227 = vmatpush1.msra.mxu0 0.0
        %1228 = vmatprep.subr.mxu0 0.0
        %1229 = vmatpush1.msra.mxu0 0.0
        %1230 = vmatprep.subr.mxu0 0.0
        %1231 = vmatpush1.msra.mxu0 0.0
        %1232 = vmatprep.subr.mxu0 0.0
        %1233 = vmatpush1.msra.mxu0 0.0
        %1234 = vmatprep.subr.mxu0 0.0
        %1235 = vmatpush1.msra.mxu0 0.0
        %1236 = vmatprep.subr.mxu0 0.0
        %1237 = vmatpush1.msra.mxu0 0.0
        %1238 = vmatprep.subr.mxu0 0.0
        %1239 = vmatpush1.msra.mxu0 0.0
        %1240 = vmatprep.subr.mxu0 0.0
        %1241 = vmatpush1.msra.mxu0 0.0
        %1242 = vmatprep.subr.mxu0 0.0
        %1243 = vmatpush1.msra.mxu0 0.0
        %1244 = vmatprep.subr.mxu0 0.0
        %1245 = vmatpush1.msra.mxu0 0.0
        %1246 = vmatprep.subr.mxu0 0.0
        %1247 = vmatpush1.msra.mxu0 0.0
        %1248 = vmatprep.subr.mxu0 0.0
        %1249 = vmatpush1.msra.mxu0 0.0
        %1250 = vmatprep.subr.mxu0 0.0
        %1251 = vmatpush1.msra.mxu0 0.0
        %1252 = vmatprep.subr.mxu0 0.0
        %1253 = vmatpush1.msra.mxu0 0.0
        %1254 = vmatprep.subr.mxu0 0.0
        %1255 = vmatpush1.msra.mxu0 0.0
        %1256 = vmatprep.subr.mxu0 0.0
        %1257 = vmatpush1.msra.mxu0 0.0
        %1258 = vmatprep.subr.mxu0 0.0
        %1259 = vmatpush1.msra.mxu0 0.0
        %1260 = vmatprep.mubr.f32.mxu0 0.0
        %1261 = vmatmul.mubr.f32.gmra.mrb[0].mxu0 %v1194
        %v1262 = vpop.f32.mrb[0].mxu0
        %v1263 = vadd.f32 %v348, %v1262
        %v1264 = vpop.f32.mrb[0].mxu0
        %1265 = vdwg.mxu0
        %v1266 = vmax.f32 %v1263, 0.0
        %v1268 = vsel %vm777, %v1266, 0
        %1270 = vmatprep.subr.mxu0 0.0
        %1271 = vmatpush1.msra.mxu0 %v328
        %1272 = vmatprep.subr.mxu0 0.0
        %1273 = vmatpush1.msra.mxu0 %v329
        %1274 = vmatprep.subr.mxu0 0.0
        %1275 = vmatpush1.msra.mxu0 %v330
        %1276 = vmatprep.subr.mxu0 0.0
        %1277 = vmatpush1.msra.mxu0 %v331
        %1278 = vmatprep.subr.mxu0 0.0
        %1279 = vmatpush1.msra.mxu0 0.0
        %1280 = vmatprep.subr.mxu0 0.0
        %1281 = vmatpush1.msra.mxu0 0.0
        %1282 = vmatprep.subr.mxu0 0.0
        %1283 = vmatpush1.msra.mxu0 0.0
        %1284 = vmatprep.subr.mxu0 0.0
        %1285 = vmatpush1.msra.mxu0 0.0
        %1286 = vmatprep.subr.mxu0 0.0
        %1287 = vmatpush1.msra.mxu0 0.0
        %1288 = vmatprep.subr.mxu0 0.0
        %1289 = vmatpush1.msra.mxu0 0.0
        %1290 = vmatprep.subr.mxu0 0.0
        %1291 = vmatpush1.msra.mxu0 0.0
        %1292 = vmatprep.subr.mxu0 0.0
        %1293 = vmatpush1.msra.mxu0 0.0
        %1294 = vmatprep.subr.mxu0 0.0
        %1295 = vmatpush1.msra.mxu0 0.0
        %1296 = vmatprep.subr.mxu0 0.0
        %1297 = vmatpush1.msra.mxu0 0.0
        %1298 = vmatprep.subr.mxu0 0.0
        %1299 = vmatpush1.msra.mxu0 0.0
        %1300 = vmatprep.subr.mxu0 0.0
        %1301 = vmatpush1.msra.mxu0 0.0
        %1302 = vmatprep.subr.mxu0 0.0
        %1303 = vmatpush1.msra.mxu0 0.0
        %1304 = vmatprep.subr.mxu0 0.0
        %1305 = vmatpush1.msra.mxu0 0.0
        %1306 = vmatprep.subr.mxu0 0.0
        %1307 = vmatpush1.msra.mxu0 0.0
        %1308 = vmatprep.subr.mxu0 0.0
        %1309 = vmatpush1.msra.mxu0 0.0
        %1310 = vmatprep.subr.mxu0 0.0
        %1311 = vmatpush1.msra.mxu0 0.0
        %1312 = vmatprep.subr.mxu0 0.0
        %1313 = vmatpush1.msra.mxu0 0.0
        %1314 = vmatprep.subr.mxu0 0.0
        %1315 = vmatpush1.msra.mxu0 0.0
        %1316 = vmatprep.subr.mxu0 0.0
        %1317 = vmatpush1.msra.mxu0 0.0
        %1318 = vmatprep.subr.mxu0 0.0
        %1319 = vmatpush1.msra.mxu0 0.0
        %1320 = vmatprep.subr.mxu0 0.0
        %1321 = vmatpush1.msra.mxu0 0.0
        %1322 = vmatprep.subr.mxu0 0.0
        %1323 = vmatpush1.msra.mxu0 0.0
        %1324 = vmatprep.subr.mxu0 0.0
        %1325 = vmatpush1.msra.mxu0 0.0
        %1326 = vmatprep.subr.mxu0 0.0
        %1327 = vmatpush1.msra.mxu0 0.0
        %1328 = vmatprep.subr.mxu0 0.0
        %1329 = vmatpush1.msra.mxu0 0.0
        %1330 = vmatprep.subr.mxu0 0.0
        %1331 = vmatpush1.msra.mxu0 0.0
        %1332 = vmatprep.subr.mxu0 0.0
        %1333 = vmatpush1.msra.mxu0 0.0
        %1334 = vmatprep.mubr.f32.mxu0 0.0
        %1335 = vmatmul.mubr.f32.gmra.mrb[0].mxu0 %v1268
        %v1336 = vpop.f32.mrb[0].mxu0
        %v1337 = vadd.f32 %v353, %v1336
        %v1338 = vpop.f32.mrb[0].mxu0
        %1339 = vdwg.mxu0
        %v1340 = vadd.f32 %v1192, %v1337
        %v1341 = vsel %vm374, %v1340, 0.0
        %1342 = vadd.xlane.f32.xlu0 %v1341
        %v1343 = vpop.xlane.xlu0 %1342
        %v1344 = vmul.f32 %v1343, %v690
        %v1345 = vsub.f32 %v1340, %v1344
        %v1346 = vmul.f32 %v1345, %v1345
        %v1347 = vsel %vm374, %v1346, 0.0
        %1348 = vadd.xlane.f32.xlu0 %v1347
        %v1349 = vpop.xlane.xlu0 %1348
        %v1350 = vmul.f32 %v1349, %v690
        %v1351 = vadd.f32 %v1350, 1e-05
        %v1352 = vrsqrt.pop %v1351
        %v1353 = vmul.f32 %v1345, %v1352
        %v1354 = vmul.f32 %v1353, %v368
        %v1355 = vadd.f32 %v1354, %v373
        %1356 = vst.msk [vmem:[%s320] sm:$0xff] %vm374, %v1355
        %s1357 = sand.u32 %s206, 1
        %s1358 = scalar_lea.sflag [#allocation4], %s1357
        %s1359 = sand.u32 %s206, 1
        %s1360 = smul.addr %s1359, 8
        %s1361 = scalar_lea.vmem [#allocation5], %s1360
        // Predicated region
        $region57: #{tpu_custom_call.1} parent=51 // pred_check
          %p1362 = pneg %p216
        $region58: #{tpu_custom_call.1} parent=51 // pred_check_branch
          %1364 = sbr.rel (%p1362) target = $region60
        $region59: #{tpu_custom_call.1} parent=51 // pred_region
          %s1366 = ssub.s32 128, 128
          %1367 = vsyncadd %s1358, %s1366
          %s1368 = smul.addr %s25, 128
          %s1369 = scalar_lea.hbm %s8, %s1368
          %s1371 = sshll.u32 %s1361, 4
          %s1372 = int_to_ptr.vmem [resolvable:$true] %s1371
          %1374 = dma.vmem_to_hbm [thread:$0]  %s1372, 128, %s1369, %s1358
        $region60: #{tpu_custom_call.1} parent=51 // pred_fallthru
          _
      $region52: #{tpu_custom_call.1} parent=5 // pred_fallthru
        _
      %p1375 = scmp.le.s32.totalorder 2, %s20
      // Predicated region
      $region61: #{tpu_custom_call.1} parent=5 // pred_check
        %p1376 = pneg %p1375
      $region62: #{tpu_custom_call.1} parent=5 // pred_check_branch
        %1378 = sbr.rel (%p1376) target = $region64
      $region63: #{tpu_custom_call.1} parent=5 // pred_region
        %s1379 = ssub.s32 %s20, 2
        // Predicated region
        $region65: #{tpu_custom_call.1} parent=63 // pred_check
          %p1380 = pneg %p222
        $region66: #{tpu_custom_call.1} parent=63 // pred_check_branch
          %1382 = sbr.rel (%p1380) target = $region68
        $region67: #{tpu_custom_call.1} parent=63 // pred_region
          %s1383 = sand.u32 %s207, 1
          %s1384 = scalar_lea.sflag [#allocation4], %s1383
          %s1385 = sand.u32 %s207, 1
          %s1386 = smul.addr %s1385, 8
          %s1387 = scalar_lea.vmem [#allocation5], %s1386
          %1388 = dma.done %s1384, 128
        $region68: #{tpu_custom_call.1} parent=63 // pred_fallthru
          _
      $region64: #{tpu_custom_call.1} parent=5 // pred_fallthru
        _
    $region6: #{tpu_custom_call.1} parent=1 // loop_footer
      %s24 = sadd.s32 1, %s20
    $region7: #{tpu_custom_call.1} parent=1 // loop_footer_branch
      %19 = sbr.rel target = $region3
    $region8: #{tpu_custom_call.1} parent=1 // loop_exit
      _
    %1389 = vsyncpa [#allocation3], 1
    %s1390 = scalar_lea.sflag [#allocation3], 1
    %1391 = vsyncpa %s1390, 1
    %1392 = vsyncpa [#allocation4], 1
    %s1393 = scalar_lea.sflag [#allocation4], 1
    %1394 = vsyncpa %s1393, 1

</llo_original>
